<compile_context>
chip_gen: v7x
topology: tpu7x:2x2x1
jax: 0.10.0
libtpu: 0.0.40
codegen_flags: <defaults>
</compile_context>

<pallas_src>
import math
from functools import partial

import jax
import jax.numpy as jnp
from jax import lax
from jax.experimental import pallas as pl
from jax.experimental.pallas import tpu as pltpu


# ---------------------------------------------------------------------------
# Fused kernel: one grid step == one batch element
# ---------------------------------------------------------------------------
def _fused_part_attention_kernel(x1_ref, x2_ref, x3_ref,
                                 wq_ref, wk_ref, wv_ref, wp_ref, b_ref,
                                 o_ref, *, num_heads, scale, qkv_bias):
    x1 = x1_ref[0]                      # (N, C)
    x2 = x2_ref[0]
    x3 = x3_ref[0]
    io_dtype = x1.dtype

    # --- q / k / v projections (MXU, f32 accumulation) ----------------------
    q = jnp.dot(x1, wq_ref[...], preferred_element_type=jnp.float32)
    k = jnp.dot(x2, wk_ref[...], preferred_element_type=jnp.float32)
    v = jnp.dot(x3, wv_ref[...], preferred_element_type=jnp.float32)
    if qkv_bias:                        # static flag: only emitted when needed
        q = q + b_ref[0].astype(jnp.float32)
        k = k + b_ref[1].astype(jnp.float32)
        v = v + b_ref[2].astype(jnp.float32)

    n, c = q.shape
    dh = c // num_heads

    # --- per-head scaled-dot-product attention -------------------------------
    # Heads live side by side in the lane dimension of q/k/v; per-head compute
    # uses static lane slices, so no [B*H, N, Dh] relayout or XLA transpose is
    # ever materialized and the result is assembled directly in [N, C] order.
    head_outs = []
    for h in range(num_heads):          # static unroll (num_heads is small)
        lo = h * dh
        qh = q[:, lo:lo + dh]           # (N, Dh)
        kh = k[:, lo:lo + dh]
        vh = v[:, lo:lo + dh]
        s = lax.dot_general(qh, kh, (((1,), (1,)), ((), ())),
                            preferred_element_type=jnp.float32) * scale
        s = s - s.max(axis=-1, keepdims=True)
        p = jnp.exp(s)
        # Approximate reciprocal runs on the otherwise-idle EUP slot.
        p = p * pl.reciprocal(p.sum(axis=-1, keepdims=True), approx=True)
        head_outs.append(jnp.dot(p, vh, preferred_element_type=jnp.float32))

    attn_out = jnp.concatenate(head_outs, axis=-1)       # (N, C), lane dense

    # --- output projection (+ bias), lane-dense (N, C) store ----------------
    out = jnp.dot(attn_out.astype(io_dtype), wp_ref[...],
                  preferred_element_type=jnp.float32)
    out = out + b_ref[3].astype(jnp.float32)
    o_ref[0] = out.astype(o_ref.dtype)
    # attn_drop / proj_drop have p=0.0 -> identity in the forward pass.


# ---------------------------------------------------------------------------
# Wrapper
# ---------------------------------------------------------------------------
def part_attention_pallas(x1, x2, x3, wq, wk, wv, wp, bp, *, num_heads,
                          scale=None, bq=None, bk=None, bv=None):
    """x1/x2/x3: [B, N, C]; weights are [C_in, C_out] (transpose of PyTorch's
    [out, in]); bp: [C].  Returns [B, N, C]."""
    B, N, C = x1.shape
    assert C % num_heads == 0
    H = num_heads
    Dh = C // H
    if scale is None:
        scale = Dh ** (-0.5)

    qkv_bias = (bq is not None) or (bk is not None) or (bv is not None)
    zeros = jnp.zeros((C,), dtype=wq.dtype)
    biases = jnp.stack([
        bq if bq is not None else zeros,
        bk if bk is not None else zeros,
        bv if bv is not None else zeros,
        bp if bp is not None else zeros,
    ]).reshape(4, 1, C)

    kern = partial(_fused_part_attention_kernel, num_heads=H, scale=scale,
                   qkv_bias=qkv_bias)

    # Constant-index weight/bias blocks: single-buffer them once they are big
    # enough that double-buffering would noticeably inflate the resident VMEM
    # footprint (matters at transformer-scale C, irrelevant for tiny C).
    w_kwargs = {}
    if C * C * wq.dtype.itemsize >= (1 << 20):
        w_kwargs = dict(pipeline_mode=pl.Buffered(1))
    w_spec = pl.BlockSpec((C, C), lambda b: (0, 0), **w_kwargs)
    b_spec = pl.BlockSpec((4, 1, C), lambda b: (0, 0, 0), **w_kwargs)
    # Full-extent N / C dims -> no padding, legal for any dtype / ragged N.
    x_spec = pl.BlockSpec((1, N, C), lambda b: (b, 0, 0))

    cost = pl.CostEstimate(
        flops=8 * B * N * C * C            # four C x C projections
              + 4 * B * H * N * N * Dh,    # q@k^T and attn@v per head
        transcendentals=B * H * N * N,     # exp
        bytes_accessed=(4 * B * N * C + 4 * C * C + 4 * C)
        * x1.dtype.itemsize,
    )

    out = pl.pallas_call(
        kern,
        out_shape=jax.ShapeDtypeStruct((B, N, C), x1.dtype),
        grid_spec=pltpu.PrefetchScalarGridSpec(
            num_scalar_prefetch=0,
            grid=(B,),
            in_specs=[x_spec, x_spec, x_spec,
                      w_spec, w_spec, w_spec, w_spec, b_spec],
            out_specs=pl.BlockSpec((1, N, C), lambda b: (b, 0, 0)),
        ),
        compiler_params=pltpu.CompilerParams(
            # Batch axis parallel: both v7x TensorCores get work when B >= 2.
            dimension_semantics=("parallel",)),
        cost_estimate=cost,
    )(x1, x2, x3, wq, wk, wv, wp, biases)
    return out


# ---------------------------------------------------------------------------
# Pure-JAX reference
# ---------------------------------------------------------------------------
def part_attention_reference(x1, x2, x3, wq, wk, wv, wp, bp, *, num_heads,
                             scale=None, bq=None, bk=None, bv=None):
    B, N, C = x1.shape
    H = num_heads
    Dh = C // H
    if scale is None:
        scale = Dh ** (-0.5)

    def heads(x, w, b):
        y = x @ w
        if b is not None:
            y = y + b
        return y.reshape(B, N, H, Dh).transpose(0, 2, 1, 3)

    q, k, v = heads(x1, wq, bq), heads(x2, wk, bk), heads(x3, wv, bv)
    attn = jax.nn.softmax(
        jnp.einsum("bhqd,bhkd->bhqk", q, k) * scale, axis=-1)
    o = jnp.einsum("bhqk,bhkd->bhqd", attn, v)
    o = o.transpose(0, 2, 1, 3).reshape(B, N, C)
    return o @ wp + bp


if __name__ == "__main__":
    # Small shapes consistent with the module: dim=32, num_heads=8 -> head_dim=4
    B, N, C, H = 2, 8, 32, 8

    key = jax.random.PRNGKey(0)
    kx1, kx2, kx3, kwq, kwk, kwv, kwp, kbp = jax.random.split(key, 8)

    x1 = jax.random.normal(kx1, (B, N, C), dtype=jnp.float32)
    x2 = jax.random.normal(kx2, (B, N, C), dtype=jnp.float32)
    x3 = jax.random.normal(kx3, (B, N, C), dtype=jnp.float32)

    # nn.Linear-style uniform(-1/sqrt(fan_in), 1/sqrt(fan_in)) init.
    # PyTorch stores weight as [out, in]; we store the transpose [in, out].
    lim = 1.0 / math.sqrt(C)
    wq = jax.random.uniform(kwq, (C, C), minval=-lim, maxval=lim, dtype=jnp.float32)
    wk = jax.random.uniform(kwk, (C, C), minval=-lim, maxval=lim, dtype=jnp.float32)
    wv = jax.random.uniform(kwv, (C, C), minval=-lim, maxval=lim, dtype=jnp.float32)
    wp = jax.random.uniform(kwp, (C, C), minval=-lim, maxval=lim, dtype=jnp.float32)
    bp = jax.random.uniform(kbp, (C,), minval=-lim, maxval=lim, dtype=jnp.float32)

    # qkv_bias=False (module default) -> no q/k/v biases; proj always has bias.
    out = part_attention_pallas(x1, x2, x3, wq, wk, wv, wp, bp, num_heads=H)
    out = jax.block_until_ready(out)

    ref = part_attention_reference(x1, x2, x3, wq, wk, wv, wp, bp, num_heads=H)
    assert out.shape == (B, N, C)
    # Tolerance accommodates the approximate (EUP) reciprocal in the softmax.
    assert jnp.allclose(out, ref, atol=5e-3, rtol=5e-3), (
        "mismatch vs reference, max abs err = "
        f"{float(jnp.max(jnp.abs(out - ref)))}")

    print("KERNEL_OK")
</pallas_src>

<mosaic_0001>
module attributes {stable_mosaic.version = 11 : i64} {
  func.func @_fused_part_attention_kernel(%arg0: i32, %arg1: memref<1x8x32xf32, #tpu.memory_space<vmem>>, %arg2: memref<1x8x32xf32, #tpu.memory_space<vmem>>, %arg3: memref<1x8x32xf32, #tpu.memory_space<vmem>>, %arg4: memref<32x32xf32, #tpu.memory_space<vmem>>, %arg5: memref<32x32xf32, #tpu.memory_space<vmem>>, %arg6: memref<32x32xf32, #tpu.memory_space<vmem>>, %arg7: memref<32x32xf32, #tpu.memory_space<vmem>>, %arg8: memref<4x1x32xf32, #tpu.memory_space<vmem>>, %arg9: memref<1x8x32xf32, #tpu.memory_space<vmem>>) attributes {dimension_semantics = [#tpu.dimension_semantics<parallel>], iteration_bounds = array<i64: 2>, scalar_prefetch = 0 : i64, scratch_operands = 0 : i64, tpu.core_type = #tpu.core_type<tc>, window_params = [{transform_indices = @transform_0, window_bounds = array<i64: 1, 8, 32>}, {transform_indices = @transform_1, window_bounds = array<i64: 1, 8, 32>}, {transform_indices = @transform_2, window_bounds = array<i64: 1, 8, 32>}, {pipeline_mode = #tpu.pipeline_mode<synchronous>, transform_indices = @transform_3, window_bounds = array<i64: 32, 32>}, {pipeline_mode = #tpu.pipeline_mode<synchronous>, transform_indices = @transform_4, window_bounds = array<i64: 32, 32>}, {pipeline_mode = #tpu.pipeline_mode<synchronous>, transform_indices = @transform_5, window_bounds = array<i64: 32, 32>}, {pipeline_mode = #tpu.pipeline_mode<synchronous>, transform_indices = @transform_6, window_bounds = array<i64: 32, 32>}, {pipeline_mode = #tpu.pipeline_mode<synchronous>, transform_indices = @transform_7, window_bounds = array<i64: 4, 1, 32>}, {transform_indices = @transform_8, window_bounds = array<i64: 1, 8, 32>}]} {
    %c0 = arith.constant 0 : index
    %c0_0 = arith.constant 0 : index
    %c0_1 = arith.constant 0 : index
    %0 = vector.load %arg1[%c0, %c0_0, %c0_1] : memref<1x8x32xf32, #tpu.memory_space<vmem>>, vector<1x8x32xf32>
    %1 = vector.shape_cast %0 : vector<1x8x32xf32> to vector<8x32xf32>
    %c0_2 = arith.constant 0 : index
    %c0_3 = arith.constant 0 : index
    %c0_4 = arith.constant 0 : index
    %2 = vector.load %arg2[%c0_2, %c0_3, %c0_4] : memref<1x8x32xf32, #tpu.memory_space<vmem>>, vector<1x8x32xf32>
    %3 = vector.shape_cast %2 : vector<1x8x32xf32> to vector<8x32xf32>
    %c0_5 = arith.constant 0 : index
    %c0_6 = arith.constant 0 : index
    %c0_7 = arith.constant 0 : index
    %4 = vector.load %arg3[%c0_5, %c0_6, %c0_7] : memref<1x8x32xf32, #tpu.memory_space<vmem>>, vector<1x8x32xf32>
    %5 = vector.shape_cast %4 : vector<1x8x32xf32> to vector<8x32xf32>
    %c0_8 = arith.constant 0 : index
    %c0_9 = arith.constant 0 : index
    %6 = vector.load %arg4[%c0_8, %c0_9] : memref<32x32xf32, #tpu.memory_space<vmem>>, vector<32x32xf32>
    %cst = arith.constant dense<0.000000e+00> : vector<8x32xf32>
    %7 = tpu.matmul %1, %6, %cst {dimension_numbers = #tpu.dot_dimension_numbers<[1], [0], [0], [1], [0, 0, 1, 1], [], []>} : vector<8x32xf32>, vector<32x32xf32>, vector<8x32xf32> -> vector<8x32xf32>
    %c0_10 = arith.constant 0 : index
    %c0_11 = arith.constant 0 : index
    %8 = vector.load %arg5[%c0_10, %c0_11] : memref<32x32xf32, #tpu.memory_space<vmem>>, vector<32x32xf32>
    %cst_12 = arith.constant dense<0.000000e+00> : vector<8x32xf32>
    %9 = tpu.matmul %3, %8, %cst_12 {dimension_numbers = #tpu.dot_dimension_numbers<[1], [0], [0], [1], [0, 0, 1, 1], [], []>} : vector<8x32xf32>, vector<32x32xf32>, vector<8x32xf32> -> vector<8x32xf32>
    %c0_13 = arith.constant 0 : index
    %c0_14 = arith.constant 0 : index
    %10 = vector.load %arg6[%c0_13, %c0_14] : memref<32x32xf32, #tpu.memory_space<vmem>>, vector<32x32xf32>
    %cst_15 = arith.constant dense<0.000000e+00> : vector<8x32xf32>
    %11 = tpu.matmul %5, %10, %cst_15 {dimension_numbers = #tpu.dot_dimension_numbers<[1], [0], [0], [1], [0, 0, 1, 1], [], []>} : vector<8x32xf32>, vector<32x32xf32>, vector<8x32xf32> -> vector<8x32xf32>
    %12 = vector.extract_strided_slice %7 {offsets = [0, 0], sizes = [8, 4], strides = [1, 1]} : vector<8x32xf32> to vector<8x4xf32>
    %13 = vector.extract_strided_slice %9 {offsets = [0, 0], sizes = [8, 4], strides = [1, 1]} : vector<8x32xf32> to vector<8x4xf32>
    %14 = vector.extract_strided_slice %11 {offsets = [0, 0], sizes = [8, 4], strides = [1, 1]} : vector<8x32xf32> to vector<8x4xf32>
    %cst_16 = arith.constant dense<0.000000e+00> : vector<8x8xf32>
    %15 = tpu.matmul %12, %13, %cst_16 {dimension_numbers = #tpu.dot_dimension_numbers<[1], [1], [0], [0], [0, 0, 1, 0], [], []>} : vector<8x4xf32>, vector<8x4xf32>, vector<8x8xf32> -> vector<8x8xf32>
    %cst_17 = arith.constant 5.000000e-01 : f32
    %16 = vector.broadcast %cst_17 : f32 to vector<8x8xf32>
    %17 = arith.mulf %15, %16 : vector<8x8xf32>
    %cst_18 = arith.constant dense<0xFF800000> : vector<8xf32>
    %18 = vector.multi_reduction <maximumf>, %17, %cst_18 [1] : vector<8x8xf32> to vector<8xf32>
    %19 = vector.shape_cast %18 : vector<8xf32> to vector<8x1xf32>
    %20 = vector.broadcast %19 : vector<8x1xf32> to vector<8x8xf32>
    %21 = arith.subf %17, %20 : vector<8x8xf32>
    %22 = math.exp %21 : vector<8x8xf32>
    %cst_19 = arith.constant dense<0.000000e+00> : vector<8xf32>
    %23 = vector.multi_reduction <add>, %22, %cst_19 [1] : vector<8x8xf32> to vector<8xf32>
    %24 = vector.shape_cast %23 : vector<8xf32> to vector<8x1xf32>
    %25 = tpu.reciprocal %24 {approx = true} : vector<8x1xf32> -> vector<8x1xf32>
    %26 = vector.broadcast %25 : vector<8x1xf32> to vector<8x8xf32>
    %27 = arith.mulf %22, %26 : vector<8x8xf32>
    %cst_20 = arith.constant dense<0.000000e+00> : vector<8x4xf32>
    %28 = tpu.matmul %27, %14, %cst_20 {dimension_numbers = #tpu.dot_dimension_numbers<[1], [0], [0], [1], [0, 0, 1, 1], [], []>} : vector<8x8xf32>, vector<8x4xf32>, vector<8x4xf32> -> vector<8x4xf32>
    %29 = vector.extract_strided_slice %7 {offsets = [0, 4], sizes = [8, 4], strides = [1, 1]} : vector<8x32xf32> to vector<8x4xf32>
    %30 = vector.extract_strided_slice %9 {offsets = [0, 4], sizes = [8, 4], strides = [1, 1]} : vector<8x32xf32> to vector<8x4xf32>
    %31 = vector.extract_strided_slice %11 {offsets = [0, 4], sizes = [8, 4], strides = [1, 1]} : vector<8x32xf32> to vector<8x4xf32>
    %cst_21 = arith.constant dense<0.000000e+00> : vector<8x8xf32>
    %32 = tpu.matmul %29, %30, %cst_21 {dimension_numbers = #tpu.dot_dimension_numbers<[1], [1], [0], [0], [0, 0, 1, 0], [], []>} : vector<8x4xf32>, vector<8x4xf32>, vector<8x8xf32> -> vector<8x8xf32>
    %cst_22 = arith.constant 5.000000e-01 : f32
    %33 = vector.broadcast %cst_22 : f32 to vector<8x8xf32>
    %34 = arith.mulf %32, %33 : vector<8x8xf32>
    %cst_23 = arith.constant dense<0xFF800000> : vector<8xf32>
    %35 = vector.multi_reduction <maximumf>, %34, %cst_23 [1] : vector<8x8xf32> to vector<8xf32>
    %36 = vector.shape_cast %35 : vector<8xf32> to vector<8x1xf32>
    %37 = vector.broadcast %36 : vector<8x1xf32> to vector<8x8xf32>
    %38 = arith.subf %34, %37 : vector<8x8xf32>
    %39 = math.exp %38 : vector<8x8xf32>
    %cst_24 = arith.constant dense<0.000000e+00> : vector<8xf32>
    %40 = vector.multi_reduction <add>, %39, %cst_24 [1] : vector<8x8xf32> to vector<8xf32>
    %41 = vector.shape_cast %40 : vector<8xf32> to vector<8x1xf32>
    %42 = tpu.reciprocal %41 {approx = true} : vector<8x1xf32> -> vector<8x1xf32>
    %43 = vector.broadcast %42 : vector<8x1xf32> to vector<8x8xf32>
    %44 = arith.mulf %39, %43 : vector<8x8xf32>
    %cst_25 = arith.constant dense<0.000000e+00> : vector<8x4xf32>
    %45 = tpu.matmul %44, %31, %cst_25 {dimension_numbers = #tpu.dot_dimension_numbers<[1], [0], [0], [1], [0, 0, 1, 1], [], []>} : vector<8x8xf32>, vector<8x4xf32>, vector<8x4xf32> -> vector<8x4xf32>
    %46 = vector.extract_strided_slice %7 {offsets = [0, 8], sizes = [8, 4], strides = [1, 1]} : vector<8x32xf32> to vector<8x4xf32>
    %47 = vector.extract_strided_slice %9 {offsets = [0, 8], sizes = [8, 4], strides = [1, 1]} : vector<8x32xf32> to vector<8x4xf32>
    %48 = vector.extract_strided_slice %11 {offsets = [0, 8], sizes = [8, 4], strides = [1, 1]} : vector<8x32xf32> to vector<8x4xf32>
    %cst_26 = arith.constant dense<0.000000e+00> : vector<8x8xf32>
    %49 = tpu.matmul %46, %47, %cst_26 {dimension_numbers = #tpu.dot_dimension_numbers<[1], [1], [0], [0], [0, 0, 1, 0], [], []>} : vector<8x4xf32>, vector<8x4xf32>, vector<8x8xf32> -> vector<8x8xf32>
    %cst_27 = arith.constant 5.000000e-01 : f32
    %50 = vector.broadcast %cst_27 : f32 to vector<8x8xf32>
    %51 = arith.mulf %49, %50 : vector<8x8xf32>
    %cst_28 = arith.constant dense<0xFF800000> : vector<8xf32>
    %52 = vector.multi_reduction <maximumf>, %51, %cst_28 [1] : vector<8x8xf32> to vector<8xf32>
    %53 = vector.shape_cast %52 : vector<8xf32> to vector<8x1xf32>
    %54 = vector.broadcast %53 : vector<8x1xf32> to vector<8x8xf32>
    %55 = arith.subf %51, %54 : vector<8x8xf32>
    %56 = math.exp %55 : vector<8x8xf32>
    %cst_29 = arith.constant dense<0.000000e+00> : vector<8xf32>
    %57 = vector.multi_reduction <add>, %56, %cst_29 [1] : vector<8x8xf32> to vector<8xf32>
    %58 = vector.shape_cast %57 : vector<8xf32> to vector<8x1xf32>
    %59 = tpu.reciprocal %58 {approx = true} : vector<8x1xf32> -> vector<8x1xf32>
    %60 = vector.broadcast %59 : vector<8x1xf32> to vector<8x8xf32>
    %61 = arith.mulf %56, %60 : vector<8x8xf32>
    %cst_30 = arith.constant dense<0.000000e+00> : vector<8x4xf32>
    %62 = tpu.matmul %61, %48, %cst_30 {dimension_numbers = #tpu.dot_dimension_numbers<[1], [0], [0], [1], [0, 0, 1, 1], [], []>} : vector<8x8xf32>, vector<8x4xf32>, vector<8x4xf32> -> vector<8x4xf32>
    %63 = vector.extract_strided_slice %7 {offsets = [0, 12], sizes = [8, 4], strides = [1, 1]} : vector<8x32xf32> to vector<8x4xf32>
    %64 = vector.extract_strided_slice %9 {offsets = [0, 12], sizes = [8, 4], strides = [1, 1]} : vector<8x32xf32> to vector<8x4xf32>
    %65 = vector.extract_strided_slice %11 {offsets = [0, 12], sizes = [8, 4], strides = [1, 1]} : vector<8x32xf32> to vector<8x4xf32>
    %cst_31 = arith.constant dense<0.000000e+00> : vector<8x8xf32>
    %66 = tpu.matmul %63, %64, %cst_31 {dimension_numbers = #tpu.dot_dimension_numbers<[1], [1], [0], [0], [0, 0, 1, 0], [], []>} : vector<8x4xf32>, vector<8x4xf32>, vector<8x8xf32> -> vector<8x8xf32>
    %cst_32 = arith.constant 5.000000e-01 : f32
    %67 = vector.broadcast %cst_32 : f32 to vector<8x8xf32>
    %68 = arith.mulf %66, %67 : vector<8x8xf32>
    %cst_33 = arith.constant dense<0xFF800000> : vector<8xf32>
    %69 = vector.multi_reduction <maximumf>, %68, %cst_33 [1] : vector<8x8xf32> to vector<8xf32>
    %70 = vector.shape_cast %69 : vector<8xf32> to vector<8x1xf32>
    %71 = vector.broadcast %70 : vector<8x1xf32> to vector<8x8xf32>
    %72 = arith.subf %68, %71 : vector<8x8xf32>
    %73 = math.exp %72 : vector<8x8xf32>
    %cst_34 = arith.constant dense<0.000000e+00> : vector<8xf32>
    %74 = vector.multi_reduction <add>, %73, %cst_34 [1] : vector<8x8xf32> to vector<8xf32>
    %75 = vector.shape_cast %74 : vector<8xf32> to vector<8x1xf32>
    %76 = tpu.reciprocal %75 {approx = true} : vector<8x1xf32> -> vector<8x1xf32>
    %77 = vector.broadcast %76 : vector<8x1xf32> to vector<8x8xf32>
    %78 = arith.mulf %73, %77 : vector<8x8xf32>
    %cst_35 = arith.constant dense<0.000000e+00> : vector<8x4xf32>
    %79 = tpu.matmul %78, %65, %cst_35 {dimension_numbers = #tpu.dot_dimension_numbers<[1], [0], [0], [1], [0, 0, 1, 1], [], []>} : vector<8x8xf32>, vector<8x4xf32>, vector<8x4xf32> -> vector<8x4xf32>
    %80 = vector.extract_strided_slice %7 {offsets = [0, 16], sizes = [8, 4], strides = [1, 1]} : vector<8x32xf32> to vector<8x4xf32>
    %81 = vector.extract_strided_slice %9 {offsets = [0, 16], sizes = [8, 4], strides = [1, 1]} : vector<8x32xf32> to vector<8x4xf32>
    %82 = vector.extract_strided_slice %11 {offsets = [0, 16], sizes = [8, 4], strides = [1, 1]} : vector<8x32xf32> to vector<8x4xf32>
    %cst_36 = arith.constant dense<0.000000e+00> : vector<8x8xf32>
    %83 = tpu.matmul %80, %81, %cst_36 {dimension_numbers = #tpu.dot_dimension_numbers<[1], [1], [0], [0], [0, 0, 1, 0], [], []>} : vector<8x4xf32>, vector<8x4xf32>, vector<8x8xf32> -> vector<8x8xf32>
    %cst_37 = arith.constant 5.000000e-01 : f32
    %84 = vector.broadcast %cst_37 : f32 to vector<8x8xf32>
    %85 = arith.mulf %83, %84 : vector<8x8xf32>
    %cst_38 = arith.constant dense<0xFF800000> : vector<8xf32>
    %86 = vector.multi_reduction <maximumf>, %85, %cst_38 [1] : vector<8x8xf32> to vector<8xf32>
    %87 = vector.shape_cast %86 : vector<8xf32> to vector<8x1xf32>
    %88 = vector.broadcast %87 : vector<8x1xf32> to vector<8x8xf32>
    %89 = arith.subf %85, %88 : vector<8x8xf32>
    %90 = math.exp %89 : vector<8x8xf32>
    %cst_39 = arith.constant dense<0.000000e+00> : vector<8xf32>
    %91 = vector.multi_reduction <add>, %90, %cst_39 [1] : vector<8x8xf32> to vector<8xf32>
    %92 = vector.shape_cast %91 : vector<8xf32> to vector<8x1xf32>
    %93 = tpu.reciprocal %92 {approx = true} : vector<8x1xf32> -> vector<8x1xf32>
    %94 = vector.broadcast %93 : vector<8x1xf32> to vector<8x8xf32>
    %95 = arith.mulf %90, %94 : vector<8x8xf32>
    %cst_40 = arith.constant dense<0.000000e+00> : vector<8x4xf32>
    %96 = tpu.matmul %95, %82, %cst_40 {dimension_numbers = #tpu.dot_dimension_numbers<[1], [0], [0], [1], [0, 0, 1, 1], [], []>} : vector<8x8xf32>, vector<8x4xf32>, vector<8x4xf32> -> vector<8x4xf32>
    %97 = vector.extract_strided_slice %7 {offsets = [0, 20], sizes = [8, 4], strides = [1, 1]} : vector<8x32xf32> to vector<8x4xf32>
    %98 = vector.extract_strided_slice %9 {offsets = [0, 20], sizes = [8, 4], strides = [1, 1]} : vector<8x32xf32> to vector<8x4xf32>
    %99 = vector.extract_strided_slice %11 {offsets = [0, 20], sizes = [8, 4], strides = [1, 1]} : vector<8x32xf32> to vector<8x4xf32>
    %cst_41 = arith.constant dense<0.000000e+00> : vector<8x8xf32>
    %100 = tpu.matmul %97, %98, %cst_41 {dimension_numbers = #tpu.dot_dimension_numbers<[1], [1], [0], [0], [0, 0, 1, 0], [], []>} : vector<8x4xf32>, vector<8x4xf32>, vector<8x8xf32> -> vector<8x8xf32>
    %cst_42 = arith.constant 5.000000e-01 : f32
    %101 = vector.broadcast %cst_42 : f32 to vector<8x8xf32>
    %102 = arith.mulf %100, %101 : vector<8x8xf32>
    %cst_43 = arith.constant dense<0xFF800000> : vector<8xf32>
    %103 = vector.multi_reduction <maximumf>, %102, %cst_43 [1] : vector<8x8xf32> to vector<8xf32>
    %104 = vector.shape_cast %103 : vector<8xf32> to vector<8x1xf32>
    %105 = vector.broadcast %104 : vector<8x1xf32> to vector<8x8xf32>
    %106 = arith.subf %102, %105 : vector<8x8xf32>
    %107 = math.exp %106 : vector<8x8xf32>
    %cst_44 = arith.constant dense<0.000000e+00> : vector<8xf32>
    %108 = vector.multi_reduction <add>, %107, %cst_44 [1] : vector<8x8xf32> to vector<8xf32>
    %109 = vector.shape_cast %108 : vector<8xf32> to vector<8x1xf32>
    %110 = tpu.reciprocal %109 {approx = true} : vector<8x1xf32> -> vector<8x1xf32>
    %111 = vector.broadcast %110 : vector<8x1xf32> to vector<8x8xf32>
    %112 = arith.mulf %107, %111 : vector<8x8xf32>
    %cst_45 = arith.constant dense<0.000000e+00> : vector<8x4xf32>
    %113 = tpu.matmul %112, %99, %cst_45 {dimension_numbers = #tpu.dot_dimension_numbers<[1], [0], [0], [1], [0, 0, 1, 1], [], []>} : vector<8x8xf32>, vector<8x4xf32>, vector<8x4xf32> -> vector<8x4xf32>
    %114 = vector.extract_strided_slice %7 {offsets = [0, 24], sizes = [8, 4], strides = [1, 1]} : vector<8x32xf32> to vector<8x4xf32>
    %115 = vector.extract_strided_slice %9 {offsets = [0, 24], sizes = [8, 4], strides = [1, 1]} : vector<8x32xf32> to vector<8x4xf32>
    %116 = vector.extract_strided_slice %11 {offsets = [0, 24], sizes = [8, 4], strides = [1, 1]} : vector<8x32xf32> to vector<8x4xf32>
    %cst_46 = arith.constant dense<0.000000e+00> : vector<8x8xf32>
    %117 = tpu.matmul %114, %115, %cst_46 {dimension_numbers = #tpu.dot_dimension_numbers<[1], [1], [0], [0], [0, 0, 1, 0], [], []>} : vector<8x4xf32>, vector<8x4xf32>, vector<8x8xf32> -> vector<8x8xf32>
    %cst_47 = arith.constant 5.000000e-01 : f32
    %118 = vector.broadcast %cst_47 : f32 to vector<8x8xf32>
    %119 = arith.mulf %117, %118 : vector<8x8xf32>
    %cst_48 = arith.constant dense<0xFF800000> : vector<8xf32>
    %120 = vector.multi_reduction <maximumf>, %119, %cst_48 [1] : vector<8x8xf32> to vector<8xf32>
    %121 = vector.shape_cast %120 : vector<8xf32> to vector<8x1xf32>
    %122 = vector.broadcast %121 : vector<8x1xf32> to vector<8x8xf32>
    %123 = arith.subf %119, %122 : vector<8x8xf32>
    %124 = math.exp %123 : vector<8x8xf32>
    %cst_49 = arith.constant dense<0.000000e+00> : vector<8xf32>
    %125 = vector.multi_reduction <add>, %124, %cst_49 [1] : vector<8x8xf32> to vector<8xf32>
    %126 = vector.shape_cast %125 : vector<8xf32> to vector<8x1xf32>
    %127 = tpu.reciprocal %126 {approx = true} : vector<8x1xf32> -> vector<8x1xf32>
    %128 = vector.broadcast %127 : vector<8x1xf32> to vector<8x8xf32>
    %129 = arith.mulf %124, %128 : vector<8x8xf32>
    %cst_50 = arith.constant dense<0.000000e+00> : vector<8x4xf32>
    %130 = tpu.matmul %129, %116, %cst_50 {dimension_numbers = #tpu.dot_dimension_numbers<[1], [0], [0], [1], [0, 0, 1, 1], [], []>} : vector<8x8xf32>, vector<8x4xf32>, vector<8x4xf32> -> vector<8x4xf32>
    %131 = vector.extract_strided_slice %7 {offsets = [0, 28], sizes = [8, 4], strides = [1, 1]} : vector<8x32xf32> to vector<8x4xf32>
    %132 = vector.extract_strided_slice %9 {offsets = [0, 28], sizes = [8, 4], strides = [1, 1]} : vector<8x32xf32> to vector<8x4xf32>
    %133 = vector.extract_strided_slice %11 {offsets = [0, 28], sizes = [8, 4], strides = [1, 1]} : vector<8x32xf32> to vector<8x4xf32>
    %cst_51 = arith.constant dense<0.000000e+00> : vector<8x8xf32>
    %134 = tpu.matmul %131, %132, %cst_51 {dimension_numbers = #tpu.dot_dimension_numbers<[1], [1], [0], [0], [0, 0, 1, 0], [], []>} : vector<8x4xf32>, vector<8x4xf32>, vector<8x8xf32> -> vector<8x8xf32>
    %cst_52 = arith.constant 5.000000e-01 : f32
    %135 = vector.broadcast %cst_52 : f32 to vector<8x8xf32>
    %136 = arith.mulf %134, %135 : vector<8x8xf32>
    %cst_53 = arith.constant dense<0xFF800000> : vector<8xf32>
    %137 = vector.multi_reduction <maximumf>, %136, %cst_53 [1] : vector<8x8xf32> to vector<8xf32>
    %138 = vector.shape_cast %137 : vector<8xf32> to vector<8x1xf32>
    %139 = vector.broadcast %138 : vector<8x1xf32> to vector<8x8xf32>
    %140 = arith.subf %136, %139 : vector<8x8xf32>
    %141 = math.exp %140 : vector<8x8xf32>
    %cst_54 = arith.constant dense<0.000000e+00> : vector<8xf32>
    %142 = vector.multi_reduction <add>, %141, %cst_54 [1] : vector<8x8xf32> to vector<8xf32>
    %143 = vector.shape_cast %142 : vector<8xf32> to vector<8x1xf32>
    %144 = tpu.reciprocal %143 {approx = true} : vector<8x1xf32> -> vector<8x1xf32>
    %145 = vector.broadcast %144 : vector<8x1xf32> to vector<8x8xf32>
    %146 = arith.mulf %141, %145 : vector<8x8xf32>
    %cst_55 = arith.constant dense<0.000000e+00> : vector<8x4xf32>
    %147 = tpu.matmul %146, %133, %cst_55 {dimension_numbers = #tpu.dot_dimension_numbers<[1], [0], [0], [1], [0, 0, 1, 1], [], []>} : vector<8x8xf32>, vector<8x4xf32>, vector<8x4xf32> -> vector<8x4xf32>
    %148 = tpu.concatenate %28, %45, %62, %79, %96, %113, %130, %147 in 1 : vector<8x4xf32>, vector<8x4xf32>, vector<8x4xf32>, vector<8x4xf32>, vector<8x4xf32>, vector<8x4xf32>, vector<8x4xf32>, vector<8x4xf32> -> vector<8x32xf32>
    %c0_56 = arith.constant 0 : index
    %c0_57 = arith.constant 0 : index
    %149 = vector.load %arg7[%c0_56, %c0_57] : memref<32x32xf32, #tpu.memory_space<vmem>>, vector<32x32xf32>
    %cst_58 = arith.constant dense<0.000000e+00> : vector<8x32xf32>
    %150 = tpu.matmul %148, %149, %cst_58 {dimension_numbers = #tpu.dot_dimension_numbers<[1], [0], [0], [1], [0, 0, 1, 1], [], []>} : vector<8x32xf32>, vector<32x32xf32>, vector<8x32xf32> -> vector<8x32xf32>
    %c3 = arith.constant 3 : index
    %c0_59 = arith.constant 0 : index
    %c0_60 = arith.constant 0 : index
    %151 = vector.load %arg8[%c3, %c0_59, %c0_60] : memref<4x1x32xf32, #tpu.memory_space<vmem>>, vector<1x1x32xf32>
    %152 = vector.shape_cast %151 : vector<1x1x32xf32> to vector<1x32xf32>
    %153 = vector.broadcast %152 : vector<1x32xf32> to vector<8x32xf32>
    %154 = arith.addf %150, %153 : vector<8x32xf32>
    %c0_61 = arith.constant 0 : index
    %c0_62 = arith.constant 0 : index
    %c0_63 = arith.constant 0 : index
    %155 = vector.load %arg9[%c0_61, %c0_62, %c0_63] : memref<1x8x32xf32, #tpu.memory_space<vmem>>, vector<1x8x32xf32>
    %156 = vector.shape_cast %155 : vector<1x8x32xf32> to vector<8x32xf32>
    %157 = vector.shape_cast %154 : vector<8x32xf32> to vector<1x8x32xf32>
    tpu.vector_store %arg9[%c0_61, %c0_62, %c0_63], %157 {strides = array<i32>} : memref<1x8x32xf32, #tpu.memory_space<vmem>>, vector<1x8x32xf32>,
    return
  }
  func.func @transform_0(%arg0: i32) -> (i32, i32, i32) {
    %c0_i32 = arith.constant 0 : i32
    %c0_i32_0 = arith.constant 0 : i32
    %c0_i32_1 = arith.constant 0 : i32
    return %arg0, %c0_i32, %c0_i32_0 : i32, i32, i32
  }
  func.func @transform_1(%arg0: i32) -> (i32, i32, i32) {
    %c0_i32 = arith.constant 0 : i32
    %c0_i32_0 = arith.constant 0 : i32
    %c0_i32_1 = arith.constant 0 : i32
    return %arg0, %c0_i32, %c0_i32_0 : i32, i32, i32
  }
  func.func @transform_2(%arg0: i32) -> (i32, i32, i32) {
    %c0_i32 = arith.constant 0 : i32
    %c0_i32_0 = arith.constant 0 : i32
    %c0_i32_1 = arith.constant 0 : i32
    return %arg0, %c0_i32, %c0_i32_0 : i32, i32, i32
  }
  func.func @transform_3(%arg0: i32) -> (i32, i32) {
    %c0_i32 = arith.constant 0 : i32
    %c0_i32_0 = arith.constant 0 : i32
    %c0_i32_1 = arith.constant 0 : i32
    return %c0_i32, %c0_i32_0 : i32, i32
  }
  func.func @transform_4(%arg0: i32) -> (i32, i32) {
    %c0_i32 = arith.constant 0 : i32
    %c0_i32_0 = arith.constant 0 : i32
    %c0_i32_1 = arith.constant 0 : i32
    return %c0_i32, %c0_i32_0 : i32, i32
  }
  func.func @transform_5(%arg0: i32) -> (i32, i32) {
    %c0_i32 = arith.constant 0 : i32
    %c0_i32_0 = arith.constant 0 : i32
    %c0_i32_1 = arith.constant 0 : i32
    return %c0_i32, %c0_i32_0 : i32, i32
  }
  func.func @transform_6(%arg0: i32) -> (i32, i32) {
    %c0_i32 = arith.constant 0 : i32
    %c0_i32_0 = arith.constant 0 : i32
    %c0_i32_1 = arith.constant 0 : i32
    return %c0_i32, %c0_i32_0 : i32, i32
  }
  func.func @transform_7(%arg0: i32) -> (i32, i32, i32) {
    %c0_i32 = arith.constant 0 : i32
    %c0_i32_0 = arith.constant 0 : i32
    %c0_i32_1 = arith.constant 0 : i32
    %c0_i32_2 = arith.constant 0 : i32
    return %c0_i32, %c0_i32_0, %c0_i32_1 : i32, i32, i32
  }
  func.func @transform_8(%arg0: i32) -> (i32, i32, i32) {
    %c0_i32 = arith.constant 0 : i32
    %c0_i32_0 = arith.constant 0 : i32
    %c0_i32_1 = arith.constant 0 : i32
    return %arg0, %c0_i32, %c0_i32_0 : i32, i32, i32
  }
}

</mosaic_0001>

<llo_original>
// kernel: tpu_custom_call.1
$region0: #{tpu_custom_call.1}
  #allocation0 [shape = 'u32[]', space=smem, size = 0x4, offset = 0x4, fixed_abs, tag = 'smem constant byte address 0x4 - core index']
  #allocation1 [shape = 'u32[144,128]{1,0:T(1,128)}', space=vmem, size = 0x12000, scoped, tag = 'internal scratch']
  %s0 = inlined_call_operand.hbm [shape: f32[2,8,32], index: 0, kind: input, shape index: {}]
  %s1 = inlined_call_operand.hbm [shape: f32[2,8,32], index: 1, kind: input, shape index: {}]
  %s2 = inlined_call_operand.hbm [shape: f32[2,8,32], index: 2, kind: input, shape index: {}]
  %s3 = inlined_call_operand.hbm [shape: f32[32,32], index: 3, kind: input, shape index: {}]
  %s4 = inlined_call_operand.hbm [shape: f32[32,32], index: 4, kind: input, shape index: {}]
  %s5 = inlined_call_operand.hbm [shape: f32[32,32], index: 5, kind: input, shape index: {}]
  %s6 = inlined_call_operand.hbm [shape: f32[32,32], index: 6, kind: input, shape index: {}]
  %s7 = inlined_call_operand.vmem [shape: f32[4,1,32], index: 7, kind: input, shape index: {}]
  %s8 = inlined_call_operand.hbm [shape: f32[2,8,32], index: 8, kind: output, shape index: {}]
  %s9 = sld [smem:[#allocation0]]
  $region93: #{tpu_custom_call.1} parent=0
    _
  %s11 = ssub.s32 1, %s9
  %s12 = scalar_select 0, %s11, %s9
  $region1: #{tpu_custom_call.1} parent=0
    #allocation2 [shape = 'u8[8192]{0}', space=vmem, size = 0x2000, scoped, tag = 'input window, operand 0']
    #allocation3 [shape = 's32[2]{0}', space=sflag, size = 0x8, scoped, tag = 'scoped memory for tpu_custom_call.1']
    #allocation4 [shape = 's32[2]{0}', space=sflag, size = 0x8, scoped, tag = 'scoped memory for tpu_custom_call.1']
    #allocation5 [shape = 'u8[8192]{0}', space=vmem, size = 0x2000, scoped, tag = 'input window, operand 1']
    #allocation6 [shape = 's32[2]{0}', space=sflag, size = 0x8, scoped, tag = 'scoped memory for tpu_custom_call.1']
    #allocation7 [shape = 'u8[8192]{0}', space=vmem, size = 0x2000, scoped, tag = 'input window, operand 2']
    #allocation8 [shape = 'u8[16384]{0}', space=vmem, size = 0x4000, scoped, tag = 'input window, operand 3, single buffered']
    #allocation9 [shape = 's32[1]{0}', space=sflag, size = 0x4, scoped, tag = 'scoped memory for tpu_custom_call.1']
    #allocation10 [shape = 'u8[16384]{0}', space=vmem, size = 0x4000, scoped, tag = 'input window, operand 4, single buffered']
    #allocation11 [shape = 'u8[16384]{0}', space=vmem, size = 0x4000, scoped, tag = 'input window, operand 5, single buffered']
    #allocation12 [shape = 's32[1]{0}', space=sflag, size = 0x4, scoped, tag = 'scoped memory for tpu_custom_call.1']
    #allocation13 [shape = 'u8[16384]{0}', space=vmem, size = 0x4000, scoped, tag = 'input window, operand 6, single buffered']
    #allocation14 [shape = 'u8[8192]{0}', space=vmem, size = 0x2000, scoped, tag = 'output window, operand 0']
    %13 = vsyncpa [#allocation3], 0
    %s14 = scalar_lea.sflag [#allocation3], 1
    %15 = vsyncpa %s14, 0
    %16 = vsyncpa [#allocation6], 0
    %s17 = scalar_lea.sflag [#allocation6], 1
    %18 = vsyncpa %s17, 0
    %19 = vsyncpa [#allocation9], 0
    %20 = vsyncpa [#allocation12], 0
    %21 = vsyncpa [#allocation4], 0
    %s22 = scalar_lea.sflag [#allocation4], 1
    %23 = vsyncpa %s22, 0
    loop: start=0, step=1, limit=4
    $region2: #{tpu_custom_call.1} parent=1 // loop_pre_header
      _
    $region3: #{tpu_custom_call.1} parent=1 // loop_header
      %s25 = sphi 0, %s29
      %p26 = scmp.ge.s32.totalorder %s25, 4
      %s35 = sphi 0, %s37
      %s38 = sphi 0, %s35
      %s39 = sphi 0, %s38
      %s55 = sphi 0, %s39
      %s61 = sphi 0, %s63
      %s64 = sphi 0, %s61
      %s65 = sphi 0, %s64
      %s81 = sphi 0, %s65
      %s87 = sphi 0, %s89
      %s90 = sphi 0, %s87
      %s91 = sphi 0, %s90
      %s107 = sphi 0, %s91
      %s111 = sphi 0, %s111
      %s113 = sphi 0, %s111
      %s114 = sphi 0, %s113
      %s128 = sphi 0, %s114
      %s132 = sphi 0, %s132
      %s134 = sphi 0, %s132
      %s135 = sphi 0, %s134
      %s149 = sphi 0, %s135
      %s153 = sphi 0, %s153
      %s155 = sphi 0, %s153
      %s156 = sphi 0, %s155
      %s170 = sphi 0, %s156
      %s174 = sphi 0, %s174
      %s176 = sphi 0, %s174
      %s177 = sphi 0, %s176
      %s191 = sphi 0, %s177
      %s195 = sphi 0, %s195
      %s197 = sphi 0, %s195
      %s198 = sphi 0, %s197
      %s212 = sphi 0, %s198
      %s218 = sphi 0, %s220
      %s221 = sphi 0, %s218
      %s222 = sphi 0, %s221
      %s238 = sphi 0, %s222
    $region4: #{tpu_custom_call.1} parent=1 // loop_header_branch
      %28 = sbr.rel (%p26) target = $region8
    $region5: #{tpu_custom_call.1} parent=1 // loop_body
      %s30 = ssub.s32 %s25, 1
      %s31 = ssub.s32 %s25, 2
      %s32 = sadd.s32 %s25, 1
      %s33 = ssub.s32 %s25, %s32
      %p34 = scmp.eq.s32.totalorder %s33, 0
      %s36 = sadd.s32 %s35, 1
      %s37 = scalar_select %p34, %s35, %s36
      %p40 = pneg %p34
      %p41 = scmp.eq.s32.totalorder %s25, 1
      %p42 = por %p40, %p41
      %p43 = scmp.ne.s32.totalorder %s35, %s38
      %p44 = scmp.eq.s32.totalorder %s25, 0
      %p45 = por %p43, %p44
      %p46 = scmp.ne.s32.totalorder %s35, %s38
      %p47 = scmp.eq.s32.totalorder %s30, 1
      %p48 = por %p46, %p47
      %p49 = scmp.ne.s32.totalorder %s38, %s39
      %p50 = scmp.eq.s32.totalorder %s30, 0
      %p51 = por %p49, %p50
      %p52 = scmp.ne.s32.totalorder %s38, %s39
      %p53 = scmp.eq.s32.totalorder %s31, 1
      %p54 = por %p52, %p53
      %p56 = scmp.ne.s32.totalorder %s39, %s55
      %p57 = scmp.eq.s32.totalorder %s31, 0
      %p58 = por %p56, %p57
      %s59 = ssub.s32 %s25, %s32
      %p60 = scmp.eq.s32.totalorder %s59, 0
      %s62 = sadd.s32 %s61, 1
      %s63 = scalar_select %p60, %s61, %s62
      %p66 = pneg %p60
      %p67 = scmp.eq.s32.totalorder %s25, 1
      %p68 = por %p66, %p67
      %p69 = scmp.ne.s32.totalorder %s61, %s64
      %p70 = scmp.eq.s32.totalorder %s25, 0
      %p71 = por %p69, %p70
      %p72 = scmp.ne.s32.totalorder %s61, %s64
      %p73 = scmp.eq.s32.totalorder %s30, 1
      %p74 = por %p72, %p73
      %p75 = scmp.ne.s32.totalorder %s64, %s65
      %p76 = scmp.eq.s32.totalorder %s30, 0
      %p77 = por %p75, %p76
      %p78 = scmp.ne.s32.totalorder %s64, %s65
      %p79 = scmp.eq.s32.totalorder %s31, 1
      %p80 = por %p78, %p79
      %p82 = scmp.ne.s32.totalorder %s65, %s81
      %p83 = scmp.eq.s32.totalorder %s31, 0
      %p84 = por %p82, %p83
      %s85 = ssub.s32 %s25, %s32
      %p86 = scmp.eq.s32.totalorder %s85, 0
      %s88 = sadd.s32 %s87, 1
      %s89 = scalar_select %p86, %s87, %s88
      %p92 = pneg %p86
      %p93 = scmp.eq.s32.totalorder %s25, 1
      %p94 = por %p92, %p93
      %p95 = scmp.ne.s32.totalorder %s87, %s90
      %p96 = scmp.eq.s32.totalorder %s25, 0
      %p97 = por %p95, %p96
      %p98 = scmp.ne.s32.totalorder %s87, %s90
      %p99 = scmp.eq.s32.totalorder %s30, 1
      %p100 = por %p98, %p99
      %p101 = scmp.ne.s32.totalorder %s90, %s91
      %p102 = scmp.eq.s32.totalorder %s30, 0
      %p103 = por %p101, %p102
      %p104 = scmp.ne.s32.totalorder %s90, %s91
      %p105 = scmp.eq.s32.totalorder %s31, 1
      %p106 = por %p104, %p105
      %p108 = scmp.ne.s32.totalorder %s91, %s107
      %p109 = scmp.eq.s32.totalorder %s31, 0
      %p110 = por %p108, %p109
      %s112 = sadd.s32 %s111, 1
      %p115 = scmp.eq.s32.totalorder %s25, 1
      %p116 = scmp.ne.s32.totalorder %s111, %s113
      %p117 = scmp.eq.s32.totalorder %s25, 0
      %p118 = por %p116, %p117
      %p119 = scmp.ne.s32.totalorder %s111, %s113
      %p120 = scmp.eq.s32.totalorder %s30, 1
      %p121 = por %p119, %p120
      %p122 = scmp.ne.s32.totalorder %s113, %s114
      %p123 = scmp.eq.s32.totalorder %s30, 0
      %p124 = por %p122, %p123
      %p125 = scmp.ne.s32.totalorder %s113, %s114
      %p126 = scmp.eq.s32.totalorder %s31, 1
      %p127 = por %p125, %p126
      %p129 = scmp.ne.s32.totalorder %s114, %s128
      %p130 = scmp.eq.s32.totalorder %s31, 0
      %p131 = por %p129, %p130
      %s133 = sadd.s32 %s132, 1
      %p136 = scmp.eq.s32.totalorder %s25, 1
      %p137 = scmp.ne.s32.totalorder %s132, %s134
      %p138 = scmp.eq.s32.totalorder %s25, 0
      %p139 = por %p137, %p138
      %p140 = scmp.ne.s32.totalorder %s132, %s134
      %p141 = scmp.eq.s32.totalorder %s30, 1
      %p142 = por %p140, %p141
      %p143 = scmp.ne.s32.totalorder %s134, %s135
      %p144 = scmp.eq.s32.totalorder %s30, 0
      %p145 = por %p143, %p144
      %p146 = scmp.ne.s32.totalorder %s134, %s135
      %p147 = scmp.eq.s32.totalorder %s31, 1
      %p148 = por %p146, %p147
      %p150 = scmp.ne.s32.totalorder %s135, %s149
      %p151 = scmp.eq.s32.totalorder %s31, 0
      %p152 = por %p150, %p151
      %s154 = sadd.s32 %s153, 1
      %p157 = scmp.eq.s32.totalorder %s25, 1
      %p158 = scmp.ne.s32.totalorder %s153, %s155
      %p159 = scmp.eq.s32.totalorder %s25, 0
      %p160 = por %p158, %p159
      %p161 = scmp.ne.s32.totalorder %s153, %s155
      %p162 = scmp.eq.s32.totalorder %s30, 1
      %p163 = por %p161, %p162
      %p164 = scmp.ne.s32.totalorder %s155, %s156
      %p165 = scmp.eq.s32.totalorder %s30, 0
      %p166 = por %p164, %p165
      %p167 = scmp.ne.s32.totalorder %s155, %s156
      %p168 = scmp.eq.s32.totalorder %s31, 1
      %p169 = por %p167, %p168
      %p171 = scmp.ne.s32.totalorder %s156, %s170
      %p172 = scmp.eq.s32.totalorder %s31, 0
      %p173 = por %p171, %p172
      %s175 = sadd.s32 %s174, 1
      %p178 = scmp.eq.s32.totalorder %s25, 1
      %p179 = scmp.ne.s32.totalorder %s174, %s176
      %p180 = scmp.eq.s32.totalorder %s25, 0
      %p181 = por %p179, %p180
      %p182 = scmp.ne.s32.totalorder %s174, %s176
      %p183 = scmp.eq.s32.totalorder %s30, 1
      %p184 = por %p182, %p183
      %p185 = scmp.ne.s32.totalorder %s176, %s177
      %p186 = scmp.eq.s32.totalorder %s30, 0
      %p187 = por %p185, %p186
      %p188 = scmp.ne.s32.totalorder %s176, %s177
      %p189 = scmp.eq.s32.totalorder %s31, 1
      %p190 = por %p188, %p189
      %p192 = scmp.ne.s32.totalorder %s177, %s191
      %p193 = scmp.eq.s32.totalorder %s31, 0
      %p194 = por %p192, %p193
      %s196 = sadd.s32 %s195, 1
      %p199 = scmp.eq.s32.totalorder %s25, 1
      %p200 = scmp.ne.s32.totalorder %s195, %s197
      %p201 = scmp.eq.s32.totalorder %s25, 0
      %p202 = por %p200, %p201
      %p203 = scmp.ne.s32.totalorder %s195, %s197
      %p204 = scmp.eq.s32.totalorder %s30, 1
      %p205 = por %p203, %p204
      %p206 = scmp.ne.s32.totalorder %s197, %s198
      %p207 = scmp.eq.s32.totalorder %s30, 0
      %p208 = por %p206, %p207
      %p209 = scmp.ne.s32.totalorder %s197, %s198
      %p210 = scmp.eq.s32.totalorder %s31, 1
      %p211 = por %p209, %p210
      %p213 = scmp.ne.s32.totalorder %s198, %s212
      %p214 = scmp.eq.s32.totalorder %s31, 0
      %p215 = por %p213, %p214
      %s216 = ssub.s32 %s25, %s32
      %p217 = scmp.eq.s32.totalorder %s216, 0
      %s219 = sadd.s32 %s218, 1
      %s220 = scalar_select %p217, %s218, %s219
      %p223 = pneg %p217
      %p224 = scmp.eq.s32.totalorder %s25, 1
      %p225 = por %p223, %p224
      %p226 = scmp.ne.s32.totalorder %s218, %s221
      %p227 = scmp.eq.s32.totalorder %s25, 0
      %p228 = por %p226, %p227
      %p229 = scmp.ne.s32.totalorder %s218, %s221
      %p230 = scmp.eq.s32.totalorder %s30, 1
      %p231 = por %p229, %p230
      %p232 = scmp.ne.s32.totalorder %s221, %s222
      %p233 = scmp.eq.s32.totalorder %s30, 0
      %p234 = por %p232, %p233
      %p235 = scmp.ne.s32.totalorder %s221, %s222
      %p236 = scmp.eq.s32.totalorder %s31, 1
      %p237 = por %p235, %p236
      %p239 = scmp.ne.s32.totalorder %s222, %s238
      %p240 = scmp.eq.s32.totalorder %s31, 0
      %p241 = por %p239, %p240
      %p242 = scmp.le.s32.totalorder 1, %s25
      %p243 = scmp.lt.s32.totalorder %s25, 3
      %p244 = pnand %p242, %p243
      %p245 = pneg %p244
      // Predicated region
      $region9: #{tpu_custom_call.1} parent=5 // pred_check
        _
      $region10: #{tpu_custom_call.1} parent=5 // pred_check_branch
        %247 = sbr.rel (%p244) target = $region12
      $region11: #{tpu_custom_call.1} parent=5 // pred_region
        %s248 = ssub.s32 %s25, 1
        // Predicated region
        $region13: #{tpu_custom_call.1} parent=11 // pred_check
          %p249 = pneg %p124
        $region14: #{tpu_custom_call.1} parent=11 // pred_check_branch
          %251 = sbr.rel (%p249) target = $region16
        $region15: #{tpu_custom_call.1} parent=11 // pred_region
          %s253 = ssub.s32 512, 512
          %254 = vsyncadd [#allocation9], %s253
          %s255 = sshll.u32 [#allocation8], 4
          %s256 = int_to_ptr.vmem [resolvable:$true] %s255
          %261 = dma.hbm_to_vmem [thread:$0]  %s3, 512, %s256, [#allocation9], 128, 128, 8
        $region16: #{tpu_custom_call.1} parent=11 // pred_fallthru
          _
        // Predicated region
        $region17: #{tpu_custom_call.1} parent=11 // pred_check
          %p262 = pneg %p145
        $region18: #{tpu_custom_call.1} parent=11 // pred_check_branch
          %264 = sbr.rel (%p262) target = $region20
        $region19: #{tpu_custom_call.1} parent=11 // pred_region
          %s266 = ssub.s32 512, 512
          %267 = vsyncadd [#allocation9], %s266
          %s268 = sshll.u32 [#allocation10], 4
          %s269 = int_to_ptr.vmem [resolvable:$true] %s268
          %274 = dma.hbm_to_vmem [thread:$0]  %s4, 512, %s269, [#allocation9], 128, 128, 8
        $region20: #{tpu_custom_call.1} parent=11 // pred_fallthru
          _
        // Predicated region
        $region21: #{tpu_custom_call.1} parent=11 // pred_check
          %p275 = pneg %p166
        $region22: #{tpu_custom_call.1} parent=11 // pred_check_branch
          %277 = sbr.rel (%p275) target = $region24
        $region23: #{tpu_custom_call.1} parent=11 // pred_region
          %s279 = ssub.s32 512, 512
          %280 = vsyncadd [#allocation12], %s279
          %s281 = sshll.u32 [#allocation11], 4
          %s282 = int_to_ptr.vmem [resolvable:$true] %s281
          %287 = dma.hbm_to_vmem [thread:$0]  %s5, 512, %s282, [#allocation12], 128, 128, 8
        $region24: #{tpu_custom_call.1} parent=11 // pred_fallthru
          _
        // Predicated region
        $region25: #{tpu_custom_call.1} parent=11 // pred_check
          %p288 = pneg %p187
        $region26: #{tpu_custom_call.1} parent=11 // pred_check_branch
          %290 = sbr.rel (%p288) target = $region28
        $region27: #{tpu_custom_call.1} parent=11 // pred_region
          %s292 = ssub.s32 512, 512
          %293 = vsyncadd [#allocation12], %s292
          %s294 = sshll.u32 [#allocation13], 4
          %s295 = int_to_ptr.vmem [resolvable:$true] %s294
          %300 = dma.hbm_to_vmem [thread:$0]  %s6, 512, %s295, [#allocation12], 128, 128, 8
        $region28: #{tpu_custom_call.1} parent=11 // pred_fallthru
          _
        // Predicated region
        $region29: #{tpu_custom_call.1} parent=11 // pred_check
          %p301 = pneg %p208
        $region30: #{tpu_custom_call.1} parent=11 // pred_check_branch
          %303 = sbr.rel (%p301) target = $region32
        $region31: #{tpu_custom_call.1} parent=11 // pred_region
          _
        $region32: #{tpu_custom_call.1} parent=11 // pred_fallthru
          _
      $region12: #{tpu_custom_call.1} parent=5 // pred_fallthru
        _
      %p304 = scmp.lt.s32.totalorder %s25, 2
      // Predicated region
      $region33: #{tpu_custom_call.1} parent=5 // pred_check
        %p305 = pneg %p304
      $region34: #{tpu_custom_call.1} parent=5 // pred_check_branch
        %307 = sbr.rel (%p305) target = $region36
      $region35: #{tpu_custom_call.1} parent=5 // pred_region
        // Predicated region
        $region37: #{tpu_custom_call.1} parent=35 // pred_check
          %p308 = pneg %p45
        $region38: #{tpu_custom_call.1} parent=35 // pred_check_branch
          %310 = sbr.rel (%p308) target = $region40
        $region39: #{tpu_custom_call.1} parent=35 // pred_region
          %s311 = sand.u32 %s35, 1
          %s312 = scalar_lea.sflag [#allocation3], %s311
          %s313 = sand.u32 %s35, 1
          %s314 = smul.addr %s313, 8
          %s315 = scalar_lea.vmem [#allocation2], %s314
          %s317 = ssub.s32 128, 128
          %318 = vsyncadd %s312, %s317
          %s319 = smul.addr %s25, 128
          %s320 = scalar_lea.hbm %s0, %s319
          %s322 = sshll.u32 %s315, 4
          %s323 = int_to_ptr.vmem [resolvable:$true] %s322
          %325 = dma.hbm_to_vmem [thread:$0]  %s320, 128, %s323, %s312
        $region40: #{tpu_custom_call.1} parent=35 // pred_fallthru
          _
        // Predicated region
        $region41: #{tpu_custom_call.1} parent=35 // pred_check
          %p326 = pneg %p71
        $region42: #{tpu_custom_call.1} parent=35 // pred_check_branch
          %328 = sbr.rel (%p326) target = $region44
        $region43: #{tpu_custom_call.1} parent=35 // pred_region
          %s329 = sand.u32 %s25, 1
          %s330 = scalar_lea.sflag [#allocation6], %s329
          %s331 = sand.u32 %s61, 1
          %s332 = smul.addr %s331, 8
          %s333 = scalar_lea.vmem [#allocation5], %s332
          %s335 = ssub.s32 128, 128
          %336 = vsyncadd %s330, %s335
          %s337 = smul.addr %s25, 128
          %s338 = scalar_lea.hbm %s1, %s337
          %s340 = sshll.u32 %s333, 4
          %s341 = int_to_ptr.vmem [resolvable:$true] %s340
          %343 = dma.hbm_to_vmem [thread:$0]  %s338, 128, %s341, %s330
        $region44: #{tpu_custom_call.1} parent=35 // pred_fallthru
          _
        // Predicated region
        $region45: #{tpu_custom_call.1} parent=35 // pred_check
          %p344 = pneg %p97
        $region46: #{tpu_custom_call.1} parent=35 // pred_check_branch
          %346 = sbr.rel (%p344) target = $region48
        $region47: #{tpu_custom_call.1} parent=35 // pred_region
          %s347 = sand.u32 %s25, 1
          %s348 = scalar_lea.sflag [#allocation6], %s347
          %s349 = sand.u32 %s87, 1
          %s350 = smul.addr %s349, 8
          %s351 = scalar_lea.vmem [#allocation7], %s350
          %s353 = ssub.s32 128, 128
          %354 = vsyncadd %s348, %s353
          %s355 = smul.addr %s25, 128
          %s356 = scalar_lea.hbm %s2, %s355
          %s358 = sshll.u32 %s351, 4
          %s359 = int_to_ptr.vmem [resolvable:$true] %s358
          %361 = dma.hbm_to_vmem [thread:$0]  %s356, 128, %s359, %s348
        $region48: #{tpu_custom_call.1} parent=35 // pred_fallthru
          _
      $region36: #{tpu_custom_call.1} parent=5 // pred_fallthru
        _
      %p362 = scmp.le.s32.totalorder 1, %s25
      %p363 = scmp.lt.s32.totalorder %s25, 3
      %p364 = pnand %p362, %p363
      %p365 = pneg %p364
      // Predicated region
      $region49: #{tpu_custom_call.1} parent=5 // pred_check
        _
      $region50: #{tpu_custom_call.1} parent=5 // pred_check_branch
        %367 = sbr.rel (%p364) target = $region52
      $region51: #{tpu_custom_call.1} parent=5 // pred_region
        %s368 = ssub.s32 %s25, 1
        %s369 = sand.u32 %s38, 1
        %s370 = scalar_lea.sflag [#allocation3], %s369
        %s371 = sand.u32 %s38, 1
        %s372 = smul.addr %s371, 8
        %s373 = scalar_lea.vmem [#allocation2], %s372
        // Predicated region
        $region53: #{tpu_custom_call.1} parent=51 // pred_check
          %p374 = pneg %p51
        $region54: #{tpu_custom_call.1} parent=51 // pred_check_branch
          %376 = sbr.rel (%p374) target = $region56
        $region55: #{tpu_custom_call.1} parent=51 // pred_region
          %377 = dma.done %s370, 128
        $region56: #{tpu_custom_call.1} parent=51 // pred_fallthru
          _
        %s378 = sand.u32 %s30, 1
        %s379 = scalar_lea.sflag [#allocation6], %s378
        %s380 = sand.u32 %s64, 1
        %s381 = smul.addr %s380, 8
        %s382 = scalar_lea.vmem [#allocation5], %s381
        // Predicated region
        $region57: #{tpu_custom_call.1} parent=51 // pred_check
          %p383 = pneg %p77
        $region58: #{tpu_custom_call.1} parent=51 // pred_check_branch
          %385 = sbr.rel (%p383) target = $region60
        $region59: #{tpu_custom_call.1} parent=51 // pred_region
          %386 = dma.done %s379, 128
        $region60: #{tpu_custom_call.1} parent=51 // pred_fallthru
          _
        %s387 = sand.u32 %s30, 1
        %s388 = scalar_lea.sflag [#allocation6], %s387
        %s389 = sand.u32 %s90, 1
        %s390 = smul.addr %s389, 8
        %s391 = scalar_lea.vmem [#allocation7], %s390
        // Predicated region
        $region61: #{tpu_custom_call.1} parent=51 // pred_check
          %p392 = pneg %p103
        $region62: #{tpu_custom_call.1} parent=51 // pred_check_branch
          %394 = sbr.rel (%p392) target = $region64
        $region63: #{tpu_custom_call.1} parent=51 // pred_region
          %395 = dma.done %s388, 128
        $region64: #{tpu_custom_call.1} parent=51 // pred_fallthru
          _
        // Predicated region
        $region65: #{tpu_custom_call.1} parent=51 // pred_check
          %p396 = pneg %p124
        $region66: #{tpu_custom_call.1} parent=51 // pred_check_branch
          %398 = sbr.rel (%p396) target = $region68
        $region67: #{tpu_custom_call.1} parent=51 // pred_region
          %399 = dma.done [#allocation9], 512
        $region68: #{tpu_custom_call.1} parent=51 // pred_fallthru
          _
        // Predicated region
        $region69: #{tpu_custom_call.1} parent=51 // pred_check
          %p400 = pneg %p145
        $region70: #{tpu_custom_call.1} parent=51 // pred_check_branch
          %402 = sbr.rel (%p400) target = $region72
        $region71: #{tpu_custom_call.1} parent=51 // pred_region
          %403 = dma.done [#allocation9], 512
        $region72: #{tpu_custom_call.1} parent=51 // pred_fallthru
          _
        // Predicated region
        $region73: #{tpu_custom_call.1} parent=51 // pred_check
          %p404 = pneg %p166
        $region74: #{tpu_custom_call.1} parent=51 // pred_check_branch
          %406 = sbr.rel (%p404) target = $region76
        $region75: #{tpu_custom_call.1} parent=51 // pred_region
          %407 = dma.done [#allocation12], 512
        $region76: #{tpu_custom_call.1} parent=51 // pred_fallthru
          _
        // Predicated region
        $region77: #{tpu_custom_call.1} parent=51 // pred_check
          %p408 = pneg %p187
        $region78: #{tpu_custom_call.1} parent=51 // pred_check_branch
          %410 = sbr.rel (%p408) target = $region80
        $region79: #{tpu_custom_call.1} parent=51 // pred_region
          %411 = dma.done [#allocation12], 512
        $region80: #{tpu_custom_call.1} parent=51 // pred_fallthru
          _
        %s412 = sand.u32 %s38, 1
        %s413 = scalar_lea.sflag [#allocation3], %s412
        %s414 = sand.u32 %s38, 1
        %s415 = smul.addr %s414, 8
        %s416 = scalar_lea.vmem [#allocation2], %s415
        %p417 = pneg %p51
        %p418 = pneg %p48
        %s419 = sand.u32 %s30, 1
        %s420 = scalar_lea.sflag [#allocation6], %s419
        %s421 = sand.u32 %s64, 1
        %s422 = smul.addr %s421, 8
        %s423 = scalar_lea.vmem [#allocation5], %s422
        %p424 = pneg %p77
        %p425 = pneg %p74
        %s426 = sand.u32 %s30, 1
        %s427 = scalar_lea.sflag [#allocation6], %s426
        %s428 = sand.u32 %s90, 1
        %s429 = smul.addr %s428, 8
        %s430 = scalar_lea.vmem [#allocation7], %s429
        %p431 = pneg %p103
        %p432 = pneg %p100
        %p433 = pneg %p124
        %p434 = pneg %p121
        %p435 = pneg %p145
        %p436 = pneg %p142
        %p437 = pneg %p166
        %p438 = pneg %p163
        %p439 = pneg %p187
        %p440 = pneg %p184
        %p441 = pneg %p208
        %p442 = pneg %p205
        %p443 = pneg %p234
        %p444 = pneg %p231
        %s445 = sand.u32 %s221, 1
        %s446 = scalar_lea.sflag [#allocation4], %s445
        %s447 = sand.u32 %s221, 1
        %s448 = smul.addr %s447, 8
        %s449 = scalar_lea.vmem [#allocation14], %s448
        %v450 = vld [vmem:[%s373] sm:$0xff]
        %v451 = vld [vmem:[%s382] sm:$0xff]
        %v452 = vld [vmem:[%s391] sm:$0xff]
        %v453 = vld [vmem:[#allocation8] sm:$0xff]
        %v454 = vld [vmem:[#allocation8 + $0x8] sm:$0xff]
        %v455 = vld [vmem:[#allocation8 + $0x10] sm:$0xff]
        %v456 = vld [vmem:[#allocation8 + $0x18] sm:$0xff]
        %vm457 = vcmask 261120
        %v459 = vsel %vm457, %v450, 0
        %461 = vmatprep.subr.mxu0 0.0
        %462 = vmatpush1.msra.mxu0 %v453
        %463 = vmatprep.subr.mxu0 0.0
        %464 = vmatpush1.msra.mxu0 %v454
        %465 = vmatprep.subr.mxu0 0.0
        %466 = vmatpush1.msra.mxu0 %v455
        %467 = vmatprep.subr.mxu0 0.0
        %468 = vmatpush1.msra.mxu0 %v456
        %469 = vmatprep.subr.mxu0 0.0
        %470 = vmatpush1.msra.mxu0 0.0
        %471 = vmatprep.subr.mxu0 0.0
        %472 = vmatpush1.msra.mxu0 0.0
        %473 = vmatprep.subr.mxu0 0.0
        %474 = vmatpush1.msra.mxu0 0.0
        %475 = vmatprep.subr.mxu0 0.0
        %476 = vmatpush1.msra.mxu0 0.0
        %477 = vmatprep.subr.mxu0 0.0
        %478 = vmatpush1.msra.mxu0 0.0
        %479 = vmatprep.subr.mxu0 0.0
        %480 = vmatpush1.msra.mxu0 0.0
        %481 = vmatprep.subr.mxu0 0.0
        %482 = vmatpush1.msra.mxu0 0.0
        %483 = vmatprep.subr.mxu0 0.0
        %484 = vmatpush1.msra.mxu0 0.0
        %485 = vmatprep.subr.mxu0 0.0
        %486 = vmatpush1.msra.mxu0 0.0
        %487 = vmatprep.subr.mxu0 0.0
        %488 = vmatpush1.msra.mxu0 0.0
        %489 = vmatprep.subr.mxu0 0.0
        %490 = vmatpush1.msra.mxu0 0.0
        %491 = vmatprep.subr.mxu0 0.0
        %492 = vmatpush1.msra.mxu0 0.0
        %493 = vmatprep.subr.mxu0 0.0
        %494 = vmatpush1.msra.mxu0 0.0
        %495 = vmatprep.subr.mxu0 0.0
        %496 = vmatpush1.msra.mxu0 0.0
        %497 = vmatprep.subr.mxu0 0.0
        %498 = vmatpush1.msra.mxu0 0.0
        %499 = vmatprep.subr.mxu0 0.0
        %500 = vmatpush1.msra.mxu0 0.0
        %501 = vmatprep.subr.mxu0 0.0
        %502 = vmatpush1.msra.mxu0 0.0
        %503 = vmatprep.subr.mxu0 0.0
        %504 = vmatpush1.msra.mxu0 0.0
        %505 = vmatprep.subr.mxu0 0.0
        %506 = vmatpush1.msra.mxu0 0.0
        %507 = vmatprep.subr.mxu0 0.0
        %508 = vmatpush1.msra.mxu0 0.0
        %509 = vmatprep.subr.mxu0 0.0
        %510 = vmatpush1.msra.mxu0 0.0
        %511 = vmatprep.subr.mxu0 0.0
        %512 = vmatpush1.msra.mxu0 0.0
        %513 = vmatprep.subr.mxu0 0.0
        %514 = vmatpush1.msra.mxu0 0.0
        %515 = vmatprep.subr.mxu0 0.0
        %516 = vmatpush1.msra.mxu0 0.0
        %517 = vmatprep.subr.mxu0 0.0
        %518 = vmatpush1.msra.mxu0 0.0
        %519 = vmatprep.subr.mxu0 0.0
        %520 = vmatpush1.msra.mxu0 0.0
        %521 = vmatprep.subr.mxu0 0.0
        %522 = vmatpush1.msra.mxu0 0.0
        %523 = vmatprep.subr.mxu0 0.0
        %524 = vmatpush1.msra.mxu0 0.0
        %525 = vmatprep.mubr.f32.mxu0 0.0
        %526 = vmatmul.mubr.f32.gmra.mrb[0].mxu0 %v459
        %v527 = vpop.f32.mrb[0].mxu0
        %v528 = vadd.f32 0.0, %v527
        %v529 = vpop.f32.mrb[0].mxu0
        %530 = vdwg.mxu0
        %v531 = vld [vmem:[#allocation10] sm:$0xff]
        %v532 = vld [vmem:[#allocation10 + $0x8] sm:$0xff]
        %v533 = vld [vmem:[#allocation10 + $0x10] sm:$0xff]
        %v534 = vld [vmem:[#allocation10 + $0x18] sm:$0xff]
        %v536 = vsel %vm457, %v451, 0
        %538 = vmatprep.subr.mxu0 0.0
        %539 = vmatpush1.msra.mxu0 %v531
        %540 = vmatprep.subr.mxu0 0.0
        %541 = vmatpush1.msra.mxu0 %v532
        %542 = vmatprep.subr.mxu0 0.0
        %543 = vmatpush1.msra.mxu0 %v533
        %544 = vmatprep.subr.mxu0 0.0
        %545 = vmatpush1.msra.mxu0 %v534
        %546 = vmatprep.subr.mxu0 0.0
        %547 = vmatpush1.msra.mxu0 0.0
        %548 = vmatprep.subr.mxu0 0.0
        %549 = vmatpush1.msra.mxu0 0.0
        %550 = vmatprep.subr.mxu0 0.0
        %551 = vmatpush1.msra.mxu0 0.0
        %552 = vmatprep.subr.mxu0 0.0
        %553 = vmatpush1.msra.mxu0 0.0
        %554 = vmatprep.subr.mxu0 0.0
        %555 = vmatpush1.msra.mxu0 0.0
        %556 = vmatprep.subr.mxu0 0.0
        %557 = vmatpush1.msra.mxu0 0.0
        %558 = vmatprep.subr.mxu0 0.0
        %559 = vmatpush1.msra.mxu0 0.0
        %560 = vmatprep.subr.mxu0 0.0
        %561 = vmatpush1.msra.mxu0 0.0
        %562 = vmatprep.subr.mxu0 0.0
        %563 = vmatpush1.msra.mxu0 0.0
        %564 = vmatprep.subr.mxu0 0.0
        %565 = vmatpush1.msra.mxu0 0.0
        %566 = vmatprep.subr.mxu0 0.0
        %567 = vmatpush1.msra.mxu0 0.0
        %568 = vmatprep.subr.mxu0 0.0
        %569 = vmatpush1.msra.mxu0 0.0
        %570 = vmatprep.subr.mxu0 0.0
        %571 = vmatpush1.msra.mxu0 0.0
        %572 = vmatprep.subr.mxu0 0.0
        %573 = vmatpush1.msra.mxu0 0.0
        %574 = vmatprep.subr.mxu0 0.0
        %575 = vmatpush1.msra.mxu0 0.0
        %576 = vmatprep.subr.mxu0 0.0
        %577 = vmatpush1.msra.mxu0 0.0
        %578 = vmatprep.subr.mxu0 0.0
        %579 = vmatpush1.msra.mxu0 0.0
        %580 = vmatprep.subr.mxu0 0.0
        %581 = vmatpush1.msra.mxu0 0.0
        %582 = vmatprep.subr.mxu0 0.0
        %583 = vmatpush1.msra.mxu0 0.0
        %584 = vmatprep.subr.mxu0 0.0
        %585 = vmatpush1.msra.mxu0 0.0
        %586 = vmatprep.subr.mxu0 0.0
        %587 = vmatpush1.msra.mxu0 0.0
        %588 = vmatprep.subr.mxu0 0.0
        %589 = vmatpush1.msra.mxu0 0.0
        %590 = vmatprep.subr.mxu0 0.0
        %591 = vmatpush1.msra.mxu0 0.0
        %592 = vmatprep.subr.mxu0 0.0
        %593 = vmatpush1.msra.mxu0 0.0
        %594 = vmatprep.subr.mxu0 0.0
        %595 = vmatpush1.msra.mxu0 0.0
        %596 = vmatprep.subr.mxu0 0.0
        %597 = vmatpush1.msra.mxu0 0.0
        %598 = vmatprep.subr.mxu0 0.0
        %599 = vmatpush1.msra.mxu0 0.0
        %600 = vmatprep.subr.mxu0 0.0
        %601 = vmatpush1.msra.mxu0 0.0
        %602 = vmatprep.mubr.f32.mxu0 0.0
        %603 = vmatmul.mubr.f32.gmra.mrb[0].mxu0 %v536
        %v604 = vpop.f32.mrb[0].mxu0
        %v605 = vadd.f32 0.0, %v604
        %v606 = vpop.f32.mrb[0].mxu0
        %607 = vdwg.mxu0
        %v608 = vld [vmem:[#allocation11] sm:$0xff]
        %v609 = vld [vmem:[#allocation11 + $0x8] sm:$0xff]
        %v610 = vld [vmem:[#allocation11 + $0x10] sm:$0xff]
        %v611 = vld [vmem:[#allocation11 + $0x18] sm:$0xff]
        %v613 = vsel %vm457, %v452, 0
        %615 = vmatprep.subr.mxu0 0.0
        %616 = vmatpush1.msra.mxu0 %v608
        %617 = vmatprep.subr.mxu0 0.0
        %618 = vmatpush1.msra.mxu0 %v609
        %619 = vmatprep.subr.mxu0 0.0
        %620 = vmatpush1.msra.mxu0 %v610
        %621 = vmatprep.subr.mxu0 0.0
        %622 = vmatpush1.msra.mxu0 %v611
        %623 = vmatprep.subr.mxu0 0.0
        %624 = vmatpush1.msra.mxu0 0.0
        %625 = vmatprep.subr.mxu0 0.0
        %626 = vmatpush1.msra.mxu0 0.0
        %627 = vmatprep.subr.mxu0 0.0
        %628 = vmatpush1.msra.mxu0 0.0
        %629 = vmatprep.subr.mxu0 0.0
        %630 = vmatpush1.msra.mxu0 0.0
        %631 = vmatprep.subr.mxu0 0.0
        %632 = vmatpush1.msra.mxu0 0.0
        %633 = vmatprep.subr.mxu0 0.0
        %634 = vmatpush1.msra.mxu0 0.0
        %635 = vmatprep.subr.mxu0 0.0
        %636 = vmatpush1.msra.mxu0 0.0
        %637 = vmatprep.subr.mxu0 0.0
        %638 = vmatpush1.msra.mxu0 0.0
        %639 = vmatprep.subr.mxu0 0.0
        %640 = vmatpush1.msra.mxu0 0.0
        %641 = vmatprep.subr.mxu0 0.0
        %642 = vmatpush1.msra.mxu0 0.0
        %643 = vmatprep.subr.mxu0 0.0
        %644 = vmatpush1.msra.mxu0 0.0
        %645 = vmatprep.subr.mxu0 0.0
        %646 = vmatpush1.msra.mxu0 0.0
        %647 = vmatprep.subr.mxu0 0.0
        %648 = vmatpush1.msra.mxu0 0.0
        %649 = vmatprep.subr.mxu0 0.0
        %650 = vmatpush1.msra.mxu0 0.0
        %651 = vmatprep.subr.mxu0 0.0
        %652 = vmatpush1.msra.mxu0 0.0
        %653 = vmatprep.subr.mxu0 0.0
        %654 = vmatpush1.msra.mxu0 0.0
        %655 = vmatprep.subr.mxu0 0.0
        %656 = vmatpush1.msra.mxu0 0.0
        %657 = vmatprep.subr.mxu0 0.0
        %658 = vmatpush1.msra.mxu0 0.0
        %659 = vmatprep.subr.mxu0 0.0
        %660 = vmatpush1.msra.mxu0 0.0
        %661 = vmatprep.subr.mxu0 0.0
        %662 = vmatpush1.msra.mxu0 0.0
        %663 = vmatprep.subr.mxu0 0.0
        %664 = vmatpush1.msra.mxu0 0.0
        %665 = vmatprep.subr.mxu0 0.0
        %666 = vmatpush1.msra.mxu0 0.0
        %667 = vmatprep.subr.mxu0 0.0
        %668 = vmatpush1.msra.mxu0 0.0
        %669 = vmatprep.subr.mxu0 0.0
        %670 = vmatpush1.msra.mxu0 0.0
        %671 = vmatprep.subr.mxu0 0.0
        %672 = vmatpush1.msra.mxu0 0.0
        %673 = vmatprep.subr.mxu0 0.0
        %674 = vmatpush1.msra.mxu0 0.0
        %675 = vmatprep.subr.mxu0 0.0
        %676 = vmatpush1.msra.mxu0 0.0
        %677 = vmatprep.subr.mxu0 0.0
        %678 = vmatpush1.msra.mxu0 0.0
        %679 = vmatprep.mubr.f32.mxu0 0.0
        %680 = vmatmul.mubr.f32.gmra.mrb[0].mxu0 %v613
        %v681 = vpop.f32.mrb[0].mxu0
        %v682 = vadd.f32 0.0, %v681
        %v683 = vpop.f32.mrb[0].mxu0
        %684 = vdwg.mxu0
        %vm685 = vcmask 31744
        %v687 = vsel %vm685, %v528, 0
        %v690 = vsel %vm685, %v605, 0
        %692 = vmatprep.subr.mxu0 0.0
        %693 = vmatpush1.xpose.msra.mxu0 %v690
        %694 = vmatprep.subr.mxu0 0.0
        %695 = vmatpush1.xpose.msra.mxu0 0.0
        %696 = vmatprep.subr.mxu0 0.0
        %697 = vmatpush1.xpose.msra.mxu0 0.0
        %698 = vmatprep.subr.mxu0 0.0
        %699 = vmatpush1.xpose.msra.mxu0 0.0
        %700 = vmatprep.subr.mxu0 0.0
        %701 = vmatpush1.xpose.msra.mxu0 0.0
        %702 = vmatprep.subr.mxu0 0.0
        %703 = vmatpush1.xpose.msra.mxu0 0.0
        %704 = vmatprep.subr.mxu0 0.0
        %705 = vmatpush1.xpose.msra.mxu0 0.0
        %706 = vmatprep.subr.mxu0 0.0
        %707 = vmatpush1.xpose.msra.mxu0 0.0
        %708 = vmatprep.subr.mxu0 0.0
        %709 = vmatpush1.xpose.msra.mxu0 0.0
        %710 = vmatprep.subr.mxu0 0.0
        %711 = vmatpush1.xpose.msra.mxu0 0.0
        %712 = vmatprep.subr.mxu0 0.0
        %713 = vmatpush1.xpose.msra.mxu0 0.0
        %714 = vmatprep.subr.mxu0 0.0
        %715 = vmatpush1.xpose.msra.mxu0 0.0
        %716 = vmatprep.subr.mxu0 0.0
        %717 = vmatpush1.xpose.msra.mxu0 0.0
        %718 = vmatprep.subr.mxu0 0.0
        %719 = vmatpush1.xpose.msra.mxu0 0.0
        %720 = vmatprep.subr.mxu0 0.0
        %721 = vmatpush1.xpose.msra.mxu0 0.0
        %722 = vmatprep.subr.mxu0 0.0
        %723 = vmatpush1.xpose.msra.mxu0 0.0
        %724 = vmatprep.subr.mxu0 0.0
        %725 = vmatpush1.xpose.msra.mxu0 0.0
        %726 = vmatprep.subr.mxu0 0.0
        %727 = vmatpush1.xpose.msra.mxu0 0.0
        %728 = vmatprep.subr.mxu0 0.0
        %729 = vmatpush1.xpose.msra.mxu0 0.0
        %730 = vmatprep.subr.mxu0 0.0
        %731 = vmatpush1.xpose.msra.mxu0 0.0
        %732 = vmatprep.subr.mxu0 0.0
        %733 = vmatpush1.xpose.msra.mxu0 0.0
        %734 = vmatprep.subr.mxu0 0.0
        %735 = vmatpush1.xpose.msra.mxu0 0.0
        %736 = vmatprep.subr.mxu0 0.0
        %737 = vmatpush1.xpose.msra.mxu0 0.0
        %738 = vmatprep.subr.mxu0 0.0
        %739 = vmatpush1.xpose.msra.mxu0 0.0
        %740 = vmatprep.subr.mxu0 0.0
        %741 = vmatpush1.xpose.msra.mxu0 0.0
        %742 = vmatprep.subr.mxu0 0.0
        %743 = vmatpush1.xpose.msra.mxu0 0.0
        %744 = vmatprep.subr.mxu0 0.0
        %745 = vmatpush1.xpose.msra.mxu0 0.0
        %746 = vmatprep.subr.mxu0 0.0
        %747 = vmatpush1.xpose.msra.mxu0 0.0
        %748 = vmatprep.subr.mxu0 0.0
        %749 = vmatpush1.xpose.msra.mxu0 0.0
        %750 = vmatprep.subr.mxu0 0.0
        %751 = vmatpush1.xpose.msra.mxu0 0.0
        %752 = vmatprep.subr.mxu0 0.0
        %753 = vmatpush1.xpose.msra.mxu0 0.0
        %754 = vmatprep.subr.mxu0 0.0
        %755 = vmatpush1.xpose.msra.mxu0 0.0
        %756 = vmatprep.mubr.f32.mxu0 0.0
        %757 = vmatmul.mubr.f32.gmra.mrb[0].mxu0 %v687
        %v758 = vpop.f32.mrb[0].mxu0
        %v759 = vadd.f32 0.0, %v758
        %v760 = vpop.f32.mrb[0].mxu0
        %761 = vdwg.mxu0
        %v762 = vmul.f32 %v759, 0.5
        %vm763 = vcmask 64512
        %v764 = vsel %vm763, %v762, -inf
        %765 = vmax.xlane.f32.xlu0 %v764
        %v766 = vpop.xlane.xlu0 %765
        %v767 = vsub.f32 %v762, %v766
        %v768 = vmul.f32 %v767, 1.442695
        %v769 = vpow.pop %v768
        %v770 = vsel %vm763, %v769, 0.0
        %771 = vadd.xlane.f32.xlu0 %v770
        %v772 = vpop.xlane.xlu0 %771
        %v773 = vrcp.pop %v772
        %v774 = vmul.f32 %v769, %v773
        %v776 = vsel %vm763, %v774, 0
        %778 = vmatprep.subr.mxu0 0.0
        %779 = vmatpush1.msra.mxu0 %v682
        %780 = vmatprep.subr.mxu0 0.0
        %781 = vmatpush1.msra.mxu0 0.0
        %782 = vmatprep.subr.mxu0 0.0
        %783 = vmatpush1.msra.mxu0 0.0
        %784 = vmatprep.subr.mxu0 0.0
        %785 = vmatpush1.msra.mxu0 0.0
        %786 = vmatprep.subr.mxu0 0.0
        %787 = vmatpush1.msra.mxu0 0.0
        %788 = vmatprep.subr.mxu0 0.0
        %789 = vmatpush1.msra.mxu0 0.0
        %790 = vmatprep.subr.mxu0 0.0
        %791 = vmatpush1.msra.mxu0 0.0
        %792 = vmatprep.subr.mxu0 0.0
        %793 = vmatpush1.msra.mxu0 0.0
        %794 = vmatprep.subr.mxu0 0.0
        %795 = vmatpush1.msra.mxu0 0.0
        %796 = vmatprep.subr.mxu0 0.0
        %797 = vmatpush1.msra.mxu0 0.0
        %798 = vmatprep.subr.mxu0 0.0
        %799 = vmatpush1.msra.mxu0 0.0
        %800 = vmatprep.subr.mxu0 0.0
        %801 = vmatpush1.msra.mxu0 0.0
        %802 = vmatprep.subr.mxu0 0.0
        %803 = vmatpush1.msra.mxu0 0.0
        %804 = vmatprep.subr.mxu0 0.0
        %805 = vmatpush1.msra.mxu0 0.0
        %806 = vmatprep.subr.mxu0 0.0
        %807 = vmatpush1.msra.mxu0 0.0
        %808 = vmatprep.subr.mxu0 0.0
        %809 = vmatpush1.msra.mxu0 0.0
        %810 = vmatprep.subr.mxu0 0.0
        %811 = vmatpush1.msra.mxu0 0.0
        %812 = vmatprep.subr.mxu0 0.0
        %813 = vmatpush1.msra.mxu0 0.0
        %814 = vmatprep.subr.mxu0 0.0
        %815 = vmatpush1.msra.mxu0 0.0
        %816 = vmatprep.subr.mxu0 0.0
        %817 = vmatpush1.msra.mxu0 0.0
        %818 = vmatprep.subr.mxu0 0.0
        %819 = vmatpush1.msra.mxu0 0.0
        %820 = vmatprep.subr.mxu0 0.0
        %821 = vmatpush1.msra.mxu0 0.0
        %822 = vmatprep.subr.mxu0 0.0
        %823 = vmatpush1.msra.mxu0 0.0
        %824 = vmatprep.subr.mxu0 0.0
        %825 = vmatpush1.msra.mxu0 0.0
        %826 = vmatprep.subr.mxu0 0.0
        %827 = vmatpush1.msra.mxu0 0.0
        %828 = vmatprep.subr.mxu0 0.0
        %829 = vmatpush1.msra.mxu0 0.0
        %830 = vmatprep.subr.mxu0 0.0
        %831 = vmatpush1.msra.mxu0 0.0
        %832 = vmatprep.subr.mxu0 0.0
        %833 = vmatpush1.msra.mxu0 0.0
        %834 = vmatprep.subr.mxu0 0.0
        %835 = vmatpush1.msra.mxu0 0.0
        %836 = vmatprep.subr.mxu0 0.0
        %837 = vmatpush1.msra.mxu0 0.0
        %838 = vmatprep.subr.mxu0 0.0
        %839 = vmatpush1.msra.mxu0 0.0
        %840 = vmatprep.subr.mxu0 0.0
        %841 = vmatpush1.msra.mxu0 0.0
        %842 = vmatprep.mubr.f32.mxu0 0.0
        %843 = vmatmul.mubr.f32.gmra.mrb[0].mxu0 %v776
        %v844 = vpop.f32.mrb[0].mxu0
        %v845 = vadd.f32 0.0, %v844
        %v846 = vpop.f32.mrb[0].mxu0
        %847 = vdwg.mxu0
        %848 = vrot.lane.b32.xlu0 %v528, 124
        %v849 = vpop.permute.xlu0 %848
        %850 = vrot.lane.b32.xlu0 %v605, 124
        %v851 = vpop.permute.xlu0 %850
        %v852 = vsel %vm685, %v849, 0
        %v854 = vsel %vm685, %v851, 0
        %856 = vmatprep.subr.mxu0 0.0
        %857 = vmatpush1.xpose.msra.mxu0 %v854
        %858 = vmatprep.subr.mxu0 0.0
        %859 = vmatpush1.xpose.msra.mxu0 0.0
        %860 = vmatprep.subr.mxu0 0.0
        %861 = vmatpush1.xpose.msra.mxu0 0.0
        %862 = vmatprep.subr.mxu0 0.0
        %863 = vmatpush1.xpose.msra.mxu0 0.0
        %864 = vmatprep.subr.mxu0 0.0
        %865 = vmatpush1.xpose.msra.mxu0 0.0
        %866 = vmatprep.subr.mxu0 0.0
        %867 = vmatpush1.xpose.msra.mxu0 0.0
        %868 = vmatprep.subr.mxu0 0.0
        %869 = vmatpush1.xpose.msra.mxu0 0.0
        %870 = vmatprep.subr.mxu0 0.0
        %871 = vmatpush1.xpose.msra.mxu0 0.0
        %872 = vmatprep.subr.mxu0 0.0
        %873 = vmatpush1.xpose.msra.mxu0 0.0
        %874 = vmatprep.subr.mxu0 0.0
        %875 = vmatpush1.xpose.msra.mxu0 0.0
        %876 = vmatprep.subr.mxu0 0.0
        %877 = vmatpush1.xpose.msra.mxu0 0.0
        %878 = vmatprep.subr.mxu0 0.0
        %879 = vmatpush1.xpose.msra.mxu0 0.0
        %880 = vmatprep.subr.mxu0 0.0
        %881 = vmatpush1.xpose.msra.mxu0 0.0
        %882 = vmatprep.subr.mxu0 0.0
        %883 = vmatpush1.xpose.msra.mxu0 0.0
        %884 = vmatprep.subr.mxu0 0.0
        %885 = vmatpush1.xpose.msra.mxu0 0.0
        %886 = vmatprep.subr.mxu0 0.0
        %887 = vmatpush1.xpose.msra.mxu0 0.0
        %888 = vmatprep.subr.mxu0 0.0
        %889 = vmatpush1.xpose.msra.mxu0 0.0
        %890 = vmatprep.subr.mxu0 0.0
        %891 = vmatpush1.xpose.msra.mxu0 0.0
        %892 = vmatprep.subr.mxu0 0.0
        %893 = vmatpush1.xpose.msra.mxu0 0.0
        %894 = vmatprep.subr.mxu0 0.0
        %895 = vmatpush1.xpose.msra.mxu0 0.0
        %896 = vmatprep.subr.mxu0 0.0
        %897 = vmatpush1.xpose.msra.mxu0 0.0
        %898 = vmatprep.subr.mxu0 0.0
        %899 = vmatpush1.xpose.msra.mxu0 0.0
        %900 = vmatprep.subr.mxu0 0.0
        %901 = vmatpush1.xpose.msra.mxu0 0.0
        %902 = vmatprep.subr.mxu0 0.0
        %903 = vmatpush1.xpose.msra.mxu0 0.0
        %904 = vmatprep.subr.mxu0 0.0
        %905 = vmatpush1.xpose.msra.mxu0 0.0
        %906 = vmatprep.subr.mxu0 0.0
        %907 = vmatpush1.xpose.msra.mxu0 0.0
        %908 = vmatprep.subr.mxu0 0.0
        %909 = vmatpush1.xpose.msra.mxu0 0.0
        %910 = vmatprep.subr.mxu0 0.0
        %911 = vmatpush1.xpose.msra.mxu0 0.0
        %912 = vmatprep.subr.mxu0 0.0
        %913 = vmatpush1.xpose.msra.mxu0 0.0
        %914 = vmatprep.subr.mxu0 0.0
        %915 = vmatpush1.xpose.msra.mxu0 0.0
        %916 = vmatprep.subr.mxu0 0.0
        %917 = vmatpush1.xpose.msra.mxu0 0.0
        %918 = vmatprep.subr.mxu0 0.0
        %919 = vmatpush1.xpose.msra.mxu0 0.0
        %920 = vmatprep.mubr.f32.mxu0 0.0
        %921 = vmatmul.mubr.f32.gmra.mrb[0].mxu0 %v852
        %v922 = vpop.f32.mrb[0].mxu0
        %v923 = vadd.f32 0.0, %v922
        %v924 = vpop.f32.mrb[0].mxu0
        %925 = vdwg.mxu0
        %v926 = vmul.f32 %v923, 0.5
        %v927 = vsel %vm763, %v926, -inf
        %928 = vmax.xlane.f32.xlu0 %v927
        %v929 = vpop.xlane.xlu0 %928
        %v930 = vsub.f32 %v926, %v929
        %v931 = vmul.f32 %v930, 1.442695
        %v932 = vpow.pop %v931
        %v933 = vsel %vm763, %v932, 0.0
        %934 = vadd.xlane.f32.xlu0 %v933
        %v935 = vpop.xlane.xlu0 %934
        %v936 = vrcp.pop %v935
        %v937 = vmul.f32 %v932, %v936
        %939 = vrot.lane.b32.xlu0 %v682, 124
        %v940 = vpop.permute.xlu0 %939
        %v943 = vsel %vm763, %v937, 0
        %945 = vmatprep.subr.mxu0 0.0
        %946 = vmatpush1.msra.mxu0 %v940
        %947 = vmatprep.subr.mxu0 0.0
        %948 = vmatpush1.msra.mxu0 0.0
        %949 = vmatprep.subr.mxu0 0.0
        %950 = vmatpush1.msra.mxu0 0.0
        %951 = vmatprep.subr.mxu0 0.0
        %952 = vmatpush1.msra.mxu0 0.0
        %953 = vmatprep.subr.mxu0 0.0
        %954 = vmatpush1.msra.mxu0 0.0
        %955 = vmatprep.subr.mxu0 0.0
        %956 = vmatpush1.msra.mxu0 0.0
        %957 = vmatprep.subr.mxu0 0.0
        %958 = vmatpush1.msra.mxu0 0.0
        %959 = vmatprep.subr.mxu0 0.0
        %960 = vmatpush1.msra.mxu0 0.0
        %961 = vmatprep.subr.mxu0 0.0
        %962 = vmatpush1.msra.mxu0 0.0
        %963 = vmatprep.subr.mxu0 0.0
        %964 = vmatpush1.msra.mxu0 0.0
        %965 = vmatprep.subr.mxu0 0.0
        %966 = vmatpush1.msra.mxu0 0.0
        %967 = vmatprep.subr.mxu0 0.0
        %968 = vmatpush1.msra.mxu0 0.0
        %969 = vmatprep.subr.mxu0 0.0
        %970 = vmatpush1.msra.mxu0 0.0
        %971 = vmatprep.subr.mxu0 0.0
        %972 = vmatpush1.msra.mxu0 0.0
        %973 = vmatprep.subr.mxu0 0.0
        %974 = vmatpush1.msra.mxu0 0.0
        %975 = vmatprep.subr.mxu0 0.0
        %976 = vmatpush1.msra.mxu0 0.0
        %977 = vmatprep.subr.mxu0 0.0
        %978 = vmatpush1.msra.mxu0 0.0
        %979 = vmatprep.subr.mxu0 0.0
        %980 = vmatpush1.msra.mxu0 0.0
        %981 = vmatprep.subr.mxu0 0.0
        %982 = vmatpush1.msra.mxu0 0.0
        %983 = vmatprep.subr.mxu0 0.0
        %984 = vmatpush1.msra.mxu0 0.0
        %985 = vmatprep.subr.mxu0 0.0
        %986 = vmatpush1.msra.mxu0 0.0
        %987 = vmatprep.subr.mxu0 0.0
        %988 = vmatpush1.msra.mxu0 0.0
        %989 = vmatprep.subr.mxu0 0.0
        %990 = vmatpush1.msra.mxu0 0.0
        %991 = vmatprep.subr.mxu0 0.0
        %992 = vmatpush1.msra.mxu0 0.0
        %993 = vmatprep.subr.mxu0 0.0
        %994 = vmatpush1.msra.mxu0 0.0
        %995 = vmatprep.subr.mxu0 0.0
        %996 = vmatpush1.msra.mxu0 0.0
        %997 = vmatprep.subr.mxu0 0.0
        %998 = vmatpush1.msra.mxu0 0.0
        %999 = vmatprep.subr.mxu0 0.0
        %1000 = vmatpush1.msra.mxu0 0.0
        %1001 = vmatprep.subr.mxu0 0.0
        %1002 = vmatpush1.msra.mxu0 0.0
        %1003 = vmatprep.subr.mxu0 0.0
        %1004 = vmatpush1.msra.mxu0 0.0
        %1005 = vmatprep.subr.mxu0 0.0
        %1006 = vmatpush1.msra.mxu0 0.0
        %1007 = vmatprep.subr.mxu0 0.0
        %1008 = vmatpush1.msra.mxu0 0.0
        %1009 = vmatprep.mubr.f32.mxu0 0.0
        %1010 = vmatmul.mubr.f32.gmra.mrb[0].mxu0 %v943
        %v1011 = vpop.f32.mrb[0].mxu0
        %v1012 = vadd.f32 0.0, %v1011
        %v1013 = vpop.f32.mrb[0].mxu0
        %1014 = vdwg.mxu0
        %1015 = vrot.lane.b32.xlu0 %v528, 120
        %v1016 = vpop.permute.xlu0 %1015
        %1017 = vrot.lane.b32.xlu0 %v605, 120
        %v1018 = vpop.permute.xlu0 %1017
        %v1019 = vsel %vm685, %v1016, 0
        %v1021 = vsel %vm685, %v1018, 0
        %1023 = vmatprep.subr.mxu0 0.0
        %1024 = vmatpush1.xpose.msra.mxu0 %v1021
        %1025 = vmatprep.subr.mxu0 0.0
        %1026 = vmatpush1.xpose.msra.mxu0 0.0
        %1027 = vmatprep.subr.mxu0 0.0
        %1028 = vmatpush1.xpose.msra.mxu0 0.0
        %1029 = vmatprep.subr.mxu0 0.0
        %1030 = vmatpush1.xpose.msra.mxu0 0.0
        %1031 = vmatprep.subr.mxu0 0.0
        %1032 = vmatpush1.xpose.msra.mxu0 0.0
        %1033 = vmatprep.subr.mxu0 0.0
        %1034 = vmatpush1.xpose.msra.mxu0 0.0
        %1035 = vmatprep.subr.mxu0 0.0
        %1036 = vmatpush1.xpose.msra.mxu0 0.0
        %1037 = vmatprep.subr.mxu0 0.0
        %1038 = vmatpush1.xpose.msra.mxu0 0.0
        %1039 = vmatprep.subr.mxu0 0.0
        %1040 = vmatpush1.xpose.msra.mxu0 0.0
        %1041 = vmatprep.subr.mxu0 0.0
        %1042 = vmatpush1.xpose.msra.mxu0 0.0
        %1043 = vmatprep.subr.mxu0 0.0
        %1044 = vmatpush1.xpose.msra.mxu0 0.0
        %1045 = vmatprep.subr.mxu0 0.0
        %1046 = vmatpush1.xpose.msra.mxu0 0.0
        %1047 = vmatprep.subr.mxu0 0.0
        %1048 = vmatpush1.xpose.msra.mxu0 0.0
        %1049 = vmatprep.subr.mxu0 0.0
        %1050 = vmatpush1.xpose.msra.mxu0 0.0
        %1051 = vmatprep.subr.mxu0 0.0
        %1052 = vmatpush1.xpose.msra.mxu0 0.0
        %1053 = vmatprep.subr.mxu0 0.0
        %1054 = vmatpush1.xpose.msra.mxu0 0.0
        %1055 = vmatprep.subr.mxu0 0.0
        %1056 = vmatpush1.xpose.msra.mxu0 0.0
        %1057 = vmatprep.subr.mxu0 0.0
        %1058 = vmatpush1.xpose.msra.mxu0 0.0
        %1059 = vmatprep.subr.mxu0 0.0
        %1060 = vmatpush1.xpose.msra.mxu0 0.0
        %1061 = vmatprep.subr.mxu0 0.0
        %1062 = vmatpush1.xpose.msra.mxu0 0.0
        %1063 = vmatprep.subr.mxu0 0.0
        %1064 = vmatpush1.xpose.msra.mxu0 0.0
        %1065 = vmatprep.subr.mxu0 0.0
        %1066 = vmatpush1.xpose.msra.mxu0 0.0
        %1067 = vmatprep.subr.mxu0 0.0
        %1068 = vmatpush1.xpose.msra.mxu0 0.0
        %1069 = vmatprep.subr.mxu0 0.0
        %1070 = vmatpush1.xpose.msra.mxu0 0.0
        %1071 = vmatprep.subr.mxu0 0.0
        %1072 = vmatpush1.xpose.msra.mxu0 0.0
        %1073 = vmatprep.subr.mxu0 0.0
        %1074 = vmatpush1.xpose.msra.mxu0 0.0
        %1075 = vmatprep.subr.mxu0 0.0
        %1076 = vmatpush1.xpose.msra.mxu0 0.0
        %1077 = vmatprep.subr.mxu0 0.0
        %1078 = vmatpush1.xpose.msra.mxu0 0.0
        %1079 = vmatprep.subr.mxu0 0.0
        %1080 = vmatpush1.xpose.msra.mxu0 0.0
        %1081 = vmatprep.subr.mxu0 0.0
        %1082 = vmatpush1.xpose.msra.mxu0 0.0
        %1083 = vmatprep.subr.mxu0 0.0
        %1084 = vmatpush1.xpose.msra.mxu0 0.0
        %1085 = vmatprep.subr.mxu0 0.0
        %1086 = vmatpush1.xpose.msra.mxu0 0.0
        %1087 = vmatprep.mubr.f32.mxu0 0.0
        %1088 = vmatmul.mubr.f32.gmra.mrb[0].mxu0 %v1019
        %v1089 = vpop.f32.mrb[0].mxu0
        %v1090 = vadd.f32 0.0, %v1089
        %v1091 = vpop.f32.mrb[0].mxu0
        %1092 = vdwg.mxu0
        %v1093 = vmul.f32 %v1090, 0.5
        %v1094 = vsel %vm763, %v1093, -inf
        %1095 = vmax.xlane.f32.xlu0 %v1094
        %v1096 = vpop.xlane.xlu0 %1095
        %v1097 = vsub.f32 %v1093, %v1096
        %v1098 = vmul.f32 %v1097, 1.442695
        %v1099 = vpow.pop %v1098
        %v1100 = vsel %vm763, %v1099, 0.0
        %1101 = vadd.xlane.f32.xlu0 %v1100
        %v1102 = vpop.xlane.xlu0 %1101
        %v1103 = vrcp.pop %v1102
        %v1104 = vmul.f32 %v1099, %v1103
        %1105 = vrot.lane.b32.xlu0 %v682, 120
        %v1106 = vpop.permute.xlu0 %1105
        %v1109 = vsel %vm763, %v1104, 0
        %1111 = vmatprep.subr.mxu0 0.0
        %1112 = vmatpush1.msra.mxu0 %v1106
        %1113 = vmatprep.subr.mxu0 0.0
        %1114 = vmatpush1.msra.mxu0 0.0
        %1115 = vmatprep.subr.mxu0 0.0
        %1116 = vmatpush1.msra.mxu0 0.0
        %1117 = vmatprep.subr.mxu0 0.0
        %1118 = vmatpush1.msra.mxu0 0.0
        %1119 = vmatprep.subr.mxu0 0.0
        %1120 = vmatpush1.msra.mxu0 0.0
        %1121 = vmatprep.subr.mxu0 0.0
        %1122 = vmatpush1.msra.mxu0 0.0
        %1123 = vmatprep.subr.mxu0 0.0
        %1124 = vmatpush1.msra.mxu0 0.0
        %1125 = vmatprep.subr.mxu0 0.0
        %1126 = vmatpush1.msra.mxu0 0.0
        %1127 = vmatprep.subr.mxu0 0.0
        %1128 = vmatpush1.msra.mxu0 0.0
        %1129 = vmatprep.subr.mxu0 0.0
        %1130 = vmatpush1.msra.mxu0 0.0
        %1131 = vmatprep.subr.mxu0 0.0
        %1132 = vmatpush1.msra.mxu0 0.0
        %1133 = vmatprep.subr.mxu0 0.0
        %1134 = vmatpush1.msra.mxu0 0.0
        %1135 = vmatprep.subr.mxu0 0.0
        %1136 = vmatpush1.msra.mxu0 0.0
        %1137 = vmatprep.subr.mxu0 0.0
        %1138 = vmatpush1.msra.mxu0 0.0
        %1139 = vmatprep.subr.mxu0 0.0
        %1140 = vmatpush1.msra.mxu0 0.0
        %1141 = vmatprep.subr.mxu0 0.0
        %1142 = vmatpush1.msra.mxu0 0.0
        %1143 = vmatprep.subr.mxu0 0.0
        %1144 = vmatpush1.msra.mxu0 0.0
        %1145 = vmatprep.subr.mxu0 0.0
        %1146 = vmatpush1.msra.mxu0 0.0
        %1147 = vmatprep.subr.mxu0 0.0
        %1148 = vmatpush1.msra.mxu0 0.0
        %1149 = vmatprep.subr.mxu0 0.0
        %1150 = vmatpush1.msra.mxu0 0.0
        %1151 = vmatprep.subr.mxu0 0.0
        %1152 = vmatpush1.msra.mxu0 0.0
        %1153 = vmatprep.subr.mxu0 0.0
        %1154 = vmatpush1.msra.mxu0 0.0
        %1155 = vmatprep.subr.mxu0 0.0
        %1156 = vmatpush1.msra.mxu0 0.0
        %1157 = vmatprep.subr.mxu0 0.0
        %1158 = vmatpush1.msra.mxu0 0.0
        %1159 = vmatprep.subr.mxu0 0.0
        %1160 = vmatpush1.msra.mxu0 0.0
        %1161 = vmatprep.subr.mxu0 0.0
        %1162 = vmatpush1.msra.mxu0 0.0
        %1163 = vmatprep.subr.mxu0 0.0
        %1164 = vmatpush1.msra.mxu0 0.0
        %1165 = vmatprep.subr.mxu0 0.0
        %1166 = vmatpush1.msra.mxu0 0.0
        %1167 = vmatprep.subr.mxu0 0.0
        %1168 = vmatpush1.msra.mxu0 0.0
        %1169 = vmatprep.subr.mxu0 0.0
        %1170 = vmatpush1.msra.mxu0 0.0
        %1171 = vmatprep.subr.mxu0 0.0
        %1172 = vmatpush1.msra.mxu0 0.0
        %1173 = vmatprep.subr.mxu0 0.0
        %1174 = vmatpush1.msra.mxu0 0.0
        %1175 = vmatprep.mubr.f32.mxu0 0.0
        %1176 = vmatmul.mubr.f32.gmra.mrb[0].mxu0 %v1109
        %v1177 = vpop.f32.mrb[0].mxu0
        %v1178 = vadd.f32 0.0, %v1177
        %v1179 = vpop.f32.mrb[0].mxu0
        %1180 = vdwg.mxu0
        %1181 = vrot.lane.b32.xlu0 %v528, 116
        %v1182 = vpop.permute.xlu0 %1181
        %1183 = vrot.lane.b32.xlu0 %v605, 116
        %v1184 = vpop.permute.xlu0 %1183
        %v1185 = vsel %vm685, %v1182, 0
        %v1187 = vsel %vm685, %v1184, 0
        %1189 = vmatprep.subr.mxu0 0.0
        %1190 = vmatpush1.xpose.msra.mxu0 %v1187
        %1191 = vmatprep.subr.mxu0 0.0
        %1192 = vmatpush1.xpose.msra.mxu0 0.0
        %1193 = vmatprep.subr.mxu0 0.0
        %1194 = vmatpush1.xpose.msra.mxu0 0.0
        %1195 = vmatprep.subr.mxu0 0.0
        %1196 = vmatpush1.xpose.msra.mxu0 0.0
        %1197 = vmatprep.subr.mxu0 0.0
        %1198 = vmatpush1.xpose.msra.mxu0 0.0
        %1199 = vmatprep.subr.mxu0 0.0
        %1200 = vmatpush1.xpose.msra.mxu0 0.0
        %1201 = vmatprep.subr.mxu0 0.0
        %1202 = vmatpush1.xpose.msra.mxu0 0.0
        %1203 = vmatprep.subr.mxu0 0.0
        %1204 = vmatpush1.xpose.msra.mxu0 0.0
        %1205 = vmatprep.subr.mxu0 0.0
        %1206 = vmatpush1.xpose.msra.mxu0 0.0
        %1207 = vmatprep.subr.mxu0 0.0
        %1208 = vmatpush1.xpose.msra.mxu0 0.0
        %1209 = vmatprep.subr.mxu0 0.0
        %1210 = vmatpush1.xpose.msra.mxu0 0.0
        %1211 = vmatprep.subr.mxu0 0.0
        %1212 = vmatpush1.xpose.msra.mxu0 0.0
        %1213 = vmatprep.subr.mxu0 0.0
        %1214 = vmatpush1.xpose.msra.mxu0 0.0
        %1215 = vmatprep.subr.mxu0 0.0
        %1216 = vmatpush1.xpose.msra.mxu0 0.0
        %1217 = vmatprep.subr.mxu0 0.0
        %1218 = vmatpush1.xpose.msra.mxu0 0.0
        %1219 = vmatprep.subr.mxu0 0.0
        %1220 = vmatpush1.xpose.msra.mxu0 0.0
        %1221 = vmatprep.subr.mxu0 0.0
        %1222 = vmatpush1.xpose.msra.mxu0 0.0
        %1223 = vmatprep.subr.mxu0 0.0
        %1224 = vmatpush1.xpose.msra.mxu0 0.0
        %1225 = vmatprep.subr.mxu0 0.0
        %1226 = vmatpush1.xpose.msra.mxu0 0.0
        %1227 = vmatprep.subr.mxu0 0.0
        %1228 = vmatpush1.xpose.msra.mxu0 0.0
        %1229 = vmatprep.subr.mxu0 0.0
        %1230 = vmatpush1.xpose.msra.mxu0 0.0
        %1231 = vmatprep.subr.mxu0 0.0
        %1232 = vmatpush1.xpose.msra.mxu0 0.0
        %1233 = vmatprep.subr.mxu0 0.0
        %1234 = vmatpush1.xpose.msra.mxu0 0.0
        %1235 = vmatprep.subr.mxu0 0.0
        %1236 = vmatpush1.xpose.msra.mxu0 0.0
        %1237 = vmatprep.subr.mxu0 0.0
        %1238 = vmatpush1.xpose.msra.mxu0 0.0
        %1239 = vmatprep.subr.mxu0 0.0
        %1240 = vmatpush1.xpose.msra.mxu0 0.0
        %1241 = vmatprep.subr.mxu0 0.0
        %1242 = vmatpush1.xpose.msra.mxu0 0.0
        %1243 = vmatprep.subr.mxu0 0.0
        %1244 = vmatpush1.xpose.msra.mxu0 0.0
        %1245 = vmatprep.subr.mxu0 0.0
        %1246 = vmatpush1.xpose.msra.mxu0 0.0
        %1247 = vmatprep.subr.mxu0 0.0
        %1248 = vmatpush1.xpose.msra.mxu0 0.0
        %1249 = vmatprep.subr.mxu0 0.0
        %1250 = vmatpush1.xpose.msra.mxu0 0.0
        %1251 = vmatprep.subr.mxu0 0.0
        %1252 = vmatpush1.xpose.msra.mxu0 0.0
        %1253 = vmatprep.mubr.f32.mxu0 0.0
        %1254 = vmatmul.mubr.f32.gmra.mrb[0].mxu0 %v1185
        %v1255 = vpop.f32.mrb[0].mxu0
        %v1256 = vadd.f32 0.0, %v1255
        %v1257 = vpop.f32.mrb[0].mxu0
        %1258 = vdwg.mxu0
        %v1259 = vmul.f32 %v1256, 0.5
        %v1260 = vsel %vm763, %v1259, -inf
        %1261 = vmax.xlane.f32.xlu0 %v1260
        %v1262 = vpop.xlane.xlu0 %1261
        %v1263 = vsub.f32 %v1259, %v1262
        %v1264 = vmul.f32 %v1263, 1.442695
        %v1265 = vpow.pop %v1264
        %v1266 = vsel %vm763, %v1265, 0.0
        %1267 = vadd.xlane.f32.xlu0 %v1266
        %v1268 = vpop.xlane.xlu0 %1267
        %v1269 = vrcp.pop %v1268
        %v1270 = vmul.f32 %v1265, %v1269
        %1271 = vrot.lane.b32.xlu0 %v682, 116
        %v1272 = vpop.permute.xlu0 %1271
        %v1275 = vsel %vm763, %v1270, 0
        %1277 = vmatprep.subr.mxu0 0.0
        %1278 = vmatpush1.msra.mxu0 %v1272
        %1279 = vmatprep.subr.mxu0 0.0
        %1280 = vmatpush1.msra.mxu0 0.0
        %1281 = vmatprep.subr.mxu0 0.0
        %1282 = vmatpush1.msra.mxu0 0.0
        %1283 = vmatprep.subr.mxu0 0.0
        %1284 = vmatpush1.msra.mxu0 0.0
        %1285 = vmatprep.subr.mxu0 0.0
        %1286 = vmatpush1.msra.mxu0 0.0
        %1287 = vmatprep.subr.mxu0 0.0
        %1288 = vmatpush1.msra.mxu0 0.0
        %1289 = vmatprep.subr.mxu0 0.0
        %1290 = vmatpush1.msra.mxu0 0.0
        %1291 = vmatprep.subr.mxu0 0.0
        %1292 = vmatpush1.msra.mxu0 0.0
        %1293 = vmatprep.subr.mxu0 0.0
        %1294 = vmatpush1.msra.mxu0 0.0
        %1295 = vmatprep.subr.mxu0 0.0
        %1296 = vmatpush1.msra.mxu0 0.0
        %1297 = vmatprep.subr.mxu0 0.0
        %1298 = vmatpush1.msra.mxu0 0.0
        %1299 = vmatprep.subr.mxu0 0.0
        %1300 = vmatpush1.msra.mxu0 0.0
        %1301 = vmatprep.subr.mxu0 0.0
        %1302 = vmatpush1.msra.mxu0 0.0
        %1303 = vmatprep.subr.mxu0 0.0
        %1304 = vmatpush1.msra.mxu0 0.0
        %1305 = vmatprep.subr.mxu0 0.0
        %1306 = vmatpush1.msra.mxu0 0.0
        %1307 = vmatprep.subr.mxu0 0.0
        %1308 = vmatpush1.msra.mxu0 0.0
        %1309 = vmatprep.subr.mxu0 0.0
        %1310 = vmatpush1.msra.mxu0 0.0
        %1311 = vmatprep.subr.mxu0 0.0
        %1312 = vmatpush1.msra.mxu0 0.0
        %1313 = vmatprep.subr.mxu0 0.0
        %1314 = vmatpush1.msra.mxu0 0.0
        %1315 = vmatprep.subr.mxu0 0.0
        %1316 = vmatpush1.msra.mxu0 0.0
        %1317 = vmatprep.subr.mxu0 0.0
        %1318 = vmatpush1.msra.mxu0 0.0
        %1319 = vmatprep.subr.mxu0 0.0
        %1320 = vmatpush1.msra.mxu0 0.0
        %1321 = vmatprep.subr.mxu0 0.0
        %1322 = vmatpush1.msra.mxu0 0.0
        %1323 = vmatprep.subr.mxu0 0.0
        %1324 = vmatpush1.msra.mxu0 0.0
        %1325 = vmatprep.subr.mxu0 0.0
        %1326 = vmatpush1.msra.mxu0 0.0
        %1327 = vmatprep.subr.mxu0 0.0
        %1328 = vmatpush1.msra.mxu0 0.0
        %1329 = vmatprep.subr.mxu0 0.0
        %1330 = vmatpush1.msra.mxu0 0.0
        %1331 = vmatprep.subr.mxu0 0.0
        %1332 = vmatpush1.msra.mxu0 0.0
        %1333 = vmatprep.subr.mxu0 0.0
        %1334 = vmatpush1.msra.mxu0 0.0
        %1335 = vmatprep.subr.mxu0 0.0
        %1336 = vmatpush1.msra.mxu0 0.0
        %1337 = vmatprep.subr.mxu0 0.0
        %1338 = vmatpush1.msra.mxu0 0.0
        %1339 = vmatprep.subr.mxu0 0.0
        %1340 = vmatpush1.msra.mxu0 0.0
        %1341 = vmatprep.mubr.f32.mxu0 0.0
        %1342 = vmatmul.mubr.f32.gmra.mrb[0].mxu0 %v1275
        %v1343 = vpop.f32.mrb[0].mxu0
        %v1344 = vadd.f32 0.0, %v1343
        %v1345 = vpop.f32.mrb[0].mxu0
        %1346 = vdwg.mxu0
        %1347 = vrot.lane.b32.xlu0 %v528, 112
        %v1348 = vpop.permute.xlu0 %1347
        %1349 = vrot.lane.b32.xlu0 %v605, 112
        %v1350 = vpop.permute.xlu0 %1349
        %v1351 = vsel %vm685, %v1348, 0
        %v1353 = vsel %vm685, %v1350, 0
        %1355 = vmatprep.subr.mxu0 0.0
        %1356 = vmatpush1.xpose.msra.mxu0 %v1353
        %1357 = vmatprep.subr.mxu0 0.0
        %1358 = vmatpush1.xpose.msra.mxu0 0.0
        %1359 = vmatprep.subr.mxu0 0.0
        %1360 = vmatpush1.xpose.msra.mxu0 0.0
        %1361 = vmatprep.subr.mxu0 0.0
        %1362 = vmatpush1.xpose.msra.mxu0 0.0
        %1363 = vmatprep.subr.mxu0 0.0
        %1364 = vmatpush1.xpose.msra.mxu0 0.0
        %1365 = vmatprep.subr.mxu0 0.0
        %1366 = vmatpush1.xpose.msra.mxu0 0.0
        %1367 = vmatprep.subr.mxu0 0.0
        %1368 = vmatpush1.xpose.msra.mxu0 0.0
        %1369 = vmatprep.subr.mxu0 0.0
        %1370 = vmatpush1.xpose.msra.mxu0 0.0
        %1371 = vmatprep.subr.mxu0 0.0
        %1372 = vmatpush1.xpose.msra.mxu0 0.0
        %1373 = vmatprep.subr.mxu0 0.0
        %1374 = vmatpush1.xpose.msra.mxu0 0.0
        %1375 = vmatprep.subr.mxu0 0.0
        %1376 = vmatpush1.xpose.msra.mxu0 0.0
        %1377 = vmatprep.subr.mxu0 0.0
        %1378 = vmatpush1.xpose.msra.mxu0 0.0
        %1379 = vmatprep.subr.mxu0 0.0
        %1380 = vmatpush1.xpose.msra.mxu0 0.0
        %1381 = vmatprep.subr.mxu0 0.0
        %1382 = vmatpush1.xpose.msra.mxu0 0.0
        %1383 = vmatprep.subr.mxu0 0.0
        %1384 = vmatpush1.xpose.msra.mxu0 0.0
        %1385 = vmatprep.subr.mxu0 0.0
        %1386 = vmatpush1.xpose.msra.mxu0 0.0
        %1387 = vmatprep.subr.mxu0 0.0
        %1388 = vmatpush1.xpose.msra.mxu0 0.0
        %1389 = vmatprep.subr.mxu0 0.0
        %1390 = vmatpush1.xpose.msra.mxu0 0.0
        %1391 = vmatprep.subr.mxu0 0.0
        %1392 = vmatpush1.xpose.msra.mxu0 0.0
        %1393 = vmatprep.subr.mxu0 0.0
        %1394 = vmatpush1.xpose.msra.mxu0 0.0
        %1395 = vmatprep.subr.mxu0 0.0
        %1396 = vmatpush1.xpose.msra.mxu0 0.0
        %1397 = vmatprep.subr.mxu0 0.0
        %1398 = vmatpush1.xpose.msra.mxu0 0.0
        %1399 = vmatprep.subr.mxu0 0.0
        %1400 = vmatpush1.xpose.msra.mxu0 0.0
        %1401 = vmatprep.subr.mxu0 0.0
        %1402 = vmatpush1.xpose.msra.mxu0 0.0
        %1403 = vmatprep.subr.mxu0 0.0
        %1404 = vmatpush1.xpose.msra.mxu0 0.0
        %1405 = vmatprep.subr.mxu0 0.0
        %1406 = vmatpush1.xpose.msra.mxu0 0.0
        %1407 = vmatprep.subr.mxu0 0.0
        %1408 = vmatpush1.xpose.msra.mxu0 0.0
        %1409 = vmatprep.subr.mxu0 0.0
        %1410 = vmatpush1.xpose.msra.mxu0 0.0
        %1411 = vmatprep.subr.mxu0 0.0
        %1412 = vmatpush1.xpose.msra.mxu0 0.0
        %1413 = vmatprep.subr.mxu0 0.0
        %1414 = vmatpush1.xpose.msra.mxu0 0.0
        %1415 = vmatprep.subr.mxu0 0.0
        %1416 = vmatpush1.xpose.msra.mxu0 0.0
        %1417 = vmatprep.subr.mxu0 0.0
        %1418 = vmatpush1.xpose.msra.mxu0 0.0
        %1419 = vmatprep.mubr.f32.mxu0 0.0
        %1420 = vmatmul.mubr.f32.gmra.mrb[0].mxu0 %v1351
        %v1421 = vpop.f32.mrb[0].mxu0
        %v1422 = vadd.f32 0.0, %v1421
        %v1423 = vpop.f32.mrb[0].mxu0
        %1424 = vdwg.mxu0
        %v1425 = vmul.f32 %v1422, 0.5
        %v1426 = vsel %vm763, %v1425, -inf
        %1427 = vmax.xlane.f32.xlu0 %v1426
        %v1428 = vpop.xlane.xlu0 %1427
        %v1429 = vsub.f32 %v1425, %v1428
        %v1430 = vmul.f32 %v1429, 1.442695
        %v1431 = vpow.pop %v1430
        %v1432 = vsel %vm763, %v1431, 0.0
        %1433 = vadd.xlane.f32.xlu0 %v1432
        %v1434 = vpop.xlane.xlu0 %1433
        %v1435 = vrcp.pop %v1434
        %v1436 = vmul.f32 %v1431, %v1435
        %1437 = vrot.lane.b32.xlu0 %v682, 112
        %v1438 = vpop.permute.xlu0 %1437
        %v1441 = vsel %vm763, %v1436, 0
        %1443 = vmatprep.subr.mxu0 0.0
        %1444 = vmatpush1.msra.mxu0 %v1438
        %1445 = vmatprep.subr.mxu0 0.0
        %1446 = vmatpush1.msra.mxu0 0.0
        %1447 = vmatprep.subr.mxu0 0.0
        %1448 = vmatpush1.msra.mxu0 0.0
        %1449 = vmatprep.subr.mxu0 0.0
        %1450 = vmatpush1.msra.mxu0 0.0
        %1451 = vmatprep.subr.mxu0 0.0
        %1452 = vmatpush1.msra.mxu0 0.0
        %1453 = vmatprep.subr.mxu0 0.0
        %1454 = vmatpush1.msra.mxu0 0.0
        %1455 = vmatprep.subr.mxu0 0.0
        %1456 = vmatpush1.msra.mxu0 0.0
        %1457 = vmatprep.subr.mxu0 0.0
        %1458 = vmatpush1.msra.mxu0 0.0
        %1459 = vmatprep.subr.mxu0 0.0
        %1460 = vmatpush1.msra.mxu0 0.0
        %1461 = vmatprep.subr.mxu0 0.0
        %1462 = vmatpush1.msra.mxu0 0.0
        %1463 = vmatprep.subr.mxu0 0.0
        %1464 = vmatpush1.msra.mxu0 0.0
        %1465 = vmatprep.subr.mxu0 0.0
        %1466 = vmatpush1.msra.mxu0 0.0
        %1467 = vmatprep.subr.mxu0 0.0
        %1468 = vmatpush1.msra.mxu0 0.0
        %1469 = vmatprep.subr.mxu0 0.0
        %1470 = vmatpush1.msra.mxu0 0.0
        %1471 = vmatprep.subr.mxu0 0.0
        %1472 = vmatpush1.msra.mxu0 0.0
        %1473 = vmatprep.subr.mxu0 0.0
        %1474 = vmatpush1.msra.mxu0 0.0
        %1475 = vmatprep.subr.mxu0 0.0
        %1476 = vmatpush1.msra.mxu0 0.0
        %1477 = vmatprep.subr.mxu0 0.0
        %1478 = vmatpush1.msra.mxu0 0.0
        %1479 = vmatprep.subr.mxu0 0.0
        %1480 = vmatpush1.msra.mxu0 0.0
        %1481 = vmatprep.subr.mxu0 0.0
        %1482 = vmatpush1.msra.mxu0 0.0
        %1483 = vmatprep.subr.mxu0 0.0
        %1484 = vmatpush1.msra.mxu0 0.0
        %1485 = vmatprep.subr.mxu0 0.0
        %1486 = vmatpush1.msra.mxu0 0.0
        %1487 = vmatprep.subr.mxu0 0.0
        %1488 = vmatpush1.msra.mxu0 0.0
        %1489 = vmatprep.subr.mxu0 0.0
        %1490 = vmatpush1.msra.mxu0 0.0
        %1491 = vmatprep.subr.mxu0 0.0
        %1492 = vmatpush1.msra.mxu0 0.0
        %1493 = vmatprep.subr.mxu0 0.0
        %1494 = vmatpush1.msra.mxu0 0.0
        %1495 = vmatprep.subr.mxu0 0.0
        %1496 = vmatpush1.msra.mxu0 0.0
        %1497 = vmatprep.subr.mxu0 0.0
        %1498 = vmatpush1.msra.mxu0 0.0
        %1499 = vmatprep.subr.mxu0 0.0
        %1500 = vmatpush1.msra.mxu0 0.0
        %1501 = vmatprep.subr.mxu0 0.0
        %1502 = vmatpush1.msra.mxu0 0.0
        %1503 = vmatprep.subr.mxu0 0.0
        %1504 = vmatpush1.msra.mxu0 0.0
        %1505 = vmatprep.subr.mxu0 0.0
        %1506 = vmatpush1.msra.mxu0 0.0
        %1507 = vmatprep.mubr.f32.mxu0 0.0
        %1508 = vmatmul.mubr.f32.gmra.mrb[0].mxu0 %v1441
        %v1509 = vpop.f32.mrb[0].mxu0
        %v1510 = vadd.f32 0.0, %v1509
        %v1511 = vpop.f32.mrb[0].mxu0
        %1512 = vdwg.mxu0
        %1513 = vrot.lane.b32.xlu0 %v528, 108
        %v1514 = vpop.permute.xlu0 %1513
        %1515 = vrot.lane.b32.xlu0 %v605, 108
        %v1516 = vpop.permute.xlu0 %1515
        %v1517 = vsel %vm685, %v1514, 0
        %v1519 = vsel %vm685, %v1516, 0
        %1521 = vmatprep.subr.mxu0 0.0
        %1522 = vmatpush1.xpose.msra.mxu0 %v1519
        %1523 = vmatprep.subr.mxu0 0.0
        %1524 = vmatpush1.xpose.msra.mxu0 0.0
        %1525 = vmatprep.subr.mxu0 0.0
        %1526 = vmatpush1.xpose.msra.mxu0 0.0
        %1527 = vmatprep.subr.mxu0 0.0
        %1528 = vmatpush1.xpose.msra.mxu0 0.0
        %1529 = vmatprep.subr.mxu0 0.0
        %1530 = vmatpush1.xpose.msra.mxu0 0.0
        %1531 = vmatprep.subr.mxu0 0.0
        %1532 = vmatpush1.xpose.msra.mxu0 0.0
        %1533 = vmatprep.subr.mxu0 0.0
        %1534 = vmatpush1.xpose.msra.mxu0 0.0
        %1535 = vmatprep.subr.mxu0 0.0
        %1536 = vmatpush1.xpose.msra.mxu0 0.0
        %1537 = vmatprep.subr.mxu0 0.0
        %1538 = vmatpush1.xpose.msra.mxu0 0.0
        %1539 = vmatprep.subr.mxu0 0.0
        %1540 = vmatpush1.xpose.msra.mxu0 0.0
        %1541 = vmatprep.subr.mxu0 0.0
        %1542 = vmatpush1.xpose.msra.mxu0 0.0
        %1543 = vmatprep.subr.mxu0 0.0
        %1544 = vmatpush1.xpose.msra.mxu0 0.0
        %1545 = vmatprep.subr.mxu0 0.0
        %1546 = vmatpush1.xpose.msra.mxu0 0.0
        %1547 = vmatprep.subr.mxu0 0.0
        %1548 = vmatpush1.xpose.msra.mxu0 0.0
        %1549 = vmatprep.subr.mxu0 0.0
        %1550 = vmatpush1.xpose.msra.mxu0 0.0
        %1551 = vmatprep.subr.mxu0 0.0
        %1552 = vmatpush1.xpose.msra.mxu0 0.0
        %1553 = vmatprep.subr.mxu0 0.0
        %1554 = vmatpush1.xpose.msra.mxu0 0.0
        %1555 = vmatprep.subr.mxu0 0.0
        %1556 = vmatpush1.xpose.msra.mxu0 0.0
        %1557 = vmatprep.subr.mxu0 0.0
        %1558 = vmatpush1.xpose.msra.mxu0 0.0
        %1559 = vmatprep.subr.mxu0 0.0
        %1560 = vmatpush1.xpose.msra.mxu0 0.0
        %1561 = vmatprep.subr.mxu0 0.0
        %1562 = vmatpush1.xpose.msra.mxu0 0.0
        %1563 = vmatprep.subr.mxu0 0.0
        %1564 = vmatpush1.xpose.msra.mxu0 0.0
        %1565 = vmatprep.subr.mxu0 0.0
        %1566 = vmatpush1.xpose.msra.mxu0 0.0
        %1567 = vmatprep.subr.mxu0 0.0
        %1568 = vmatpush1.xpose.msra.mxu0 0.0
        %1569 = vmatprep.subr.mxu0 0.0
        %1570 = vmatpush1.xpose.msra.mxu0 0.0
        %1571 = vmatprep.subr.mxu0 0.0
        %1572 = vmatpush1.xpose.msra.mxu0 0.0
        %1573 = vmatprep.subr.mxu0 0.0
        %1574 = vmatpush1.xpose.msra.mxu0 0.0
        %1575 = vmatprep.subr.mxu0 0.0
        %1576 = vmatpush1.xpose.msra.mxu0 0.0
        %1577 = vmatprep.subr.mxu0 0.0
        %1578 = vmatpush1.xpose.msra.mxu0 0.0
        %1579 = vmatprep.subr.mxu0 0.0
        %1580 = vmatpush1.xpose.msra.mxu0 0.0
        %1581 = vmatprep.subr.mxu0 0.0
        %1582 = vmatpush1.xpose.msra.mxu0 0.0
        %1583 = vmatprep.subr.mxu0 0.0
        %1584 = vmatpush1.xpose.msra.mxu0 0.0
        %1585 = vmatprep.mubr.f32.mxu0 0.0
        %1586 = vmatmul.mubr.f32.gmra.mrb[0].mxu0 %v1517
        %v1587 = vpop.f32.mrb[0].mxu0
        %v1588 = vadd.f32 0.0, %v1587
        %v1589 = vpop.f32.mrb[0].mxu0
        %1590 = vdwg.mxu0
        %v1591 = vmul.f32 %v1588, 0.5
        %v1592 = vsel %vm763, %v1591, -inf
        %1593 = vmax.xlane.f32.xlu0 %v1592
        %v1594 = vpop.xlane.xlu0 %1593
        %v1595 = vsub.f32 %v1591, %v1594
        %v1596 = vmul.f32 %v1595, 1.442695
        %v1597 = vpow.pop %v1596
        %v1598 = vsel %vm763, %v1597, 0.0
        %1599 = vadd.xlane.f32.xlu0 %v1598
        %v1600 = vpop.xlane.xlu0 %1599
        %v1601 = vrcp.pop %v1600
        %v1602 = vmul.f32 %v1597, %v1601
        %1603 = vrot.lane.b32.xlu0 %v682, 108
        %v1604 = vpop.permute.xlu0 %1603
        %v1607 = vsel %vm763, %v1602, 0
        %1609 = vmatprep.subr.mxu0 0.0
        %1610 = vmatpush1.msra.mxu0 %v1604
        %1611 = vmatprep.subr.mxu0 0.0
        %1612 = vmatpush1.msra.mxu0 0.0
        %1613 = vmatprep.subr.mxu0 0.0
        %1614 = vmatpush1.msra.mxu0 0.0
        %1615 = vmatprep.subr.mxu0 0.0
        %1616 = vmatpush1.msra.mxu0 0.0
        %1617 = vmatprep.subr.mxu0 0.0
        %1618 = vmatpush1.msra.mxu0 0.0
        %1619 = vmatprep.subr.mxu0 0.0
        %1620 = vmatpush1.msra.mxu0 0.0
        %1621 = vmatprep.subr.mxu0 0.0
        %1622 = vmatpush1.msra.mxu0 0.0
        %1623 = vmatprep.subr.mxu0 0.0
        %1624 = vmatpush1.msra.mxu0 0.0
        %1625 = vmatprep.subr.mxu0 0.0
        %1626 = vmatpush1.msra.mxu0 0.0
        %1627 = vmatprep.subr.mxu0 0.0
        %1628 = vmatpush1.msra.mxu0 0.0
        %1629 = vmatprep.subr.mxu0 0.0
        %1630 = vmatpush1.msra.mxu0 0.0
        %1631 = vmatprep.subr.mxu0 0.0
        %1632 = vmatpush1.msra.mxu0 0.0
        %1633 = vmatprep.subr.mxu0 0.0
        %1634 = vmatpush1.msra.mxu0 0.0
        %1635 = vmatprep.subr.mxu0 0.0
        %1636 = vmatpush1.msra.mxu0 0.0
        %1637 = vmatprep.subr.mxu0 0.0
        %1638 = vmatpush1.msra.mxu0 0.0
        %1639 = vmatprep.subr.mxu0 0.0
        %1640 = vmatpush1.msra.mxu0 0.0
        %1641 = vmatprep.subr.mxu0 0.0
        %1642 = vmatpush1.msra.mxu0 0.0
        %1643 = vmatprep.subr.mxu0 0.0
        %1644 = vmatpush1.msra.mxu0 0.0
        %1645 = vmatprep.subr.mxu0 0.0
        %1646 = vmatpush1.msra.mxu0 0.0
        %1647 = vmatprep.subr.mxu0 0.0
        %1648 = vmatpush1.msra.mxu0 0.0
        %1649 = vmatprep.subr.mxu0 0.0
        %1650 = vmatpush1.msra.mxu0 0.0
        %1651 = vmatprep.subr.mxu0 0.0
        %1652 = vmatpush1.msra.mxu0 0.0
        %1653 = vmatprep.subr.mxu0 0.0
        %1654 = vmatpush1.msra.mxu0 0.0
        %1655 = vmatprep.subr.mxu0 0.0
        %1656 = vmatpush1.msra.mxu0 0.0
        %1657 = vmatprep.subr.mxu0 0.0
        %1658 = vmatpush1.msra.mxu0 0.0
        %1659 = vmatprep.subr.mxu0 0.0
        %1660 = vmatpush1.msra.mxu0 0.0
        %1661 = vmatprep.subr.mxu0 0.0
        %1662 = vmatpush1.msra.mxu0 0.0
        %1663 = vmatprep.subr.mxu0 0.0
        %1664 = vmatpush1.msra.mxu0 0.0
        %1665 = vmatprep.subr.mxu0 0.0
        %1666 = vmatpush1.msra.mxu0 0.0
        %1667 = vmatprep.subr.mxu0 0.0
        %1668 = vmatpush1.msra.mxu0 0.0
        %1669 = vmatprep.subr.mxu0 0.0
        %1670 = vmatpush1.msra.mxu0 0.0
        %1671 = vmatprep.subr.mxu0 0.0
        %1672 = vmatpush1.msra.mxu0 0.0
        %1673 = vmatprep.mubr.f32.mxu0 0.0
        %1674 = vmatmul.mubr.f32.gmra.mrb[0].mxu0 %v1607
        %v1675 = vpop.f32.mrb[0].mxu0
        %v1676 = vadd.f32 0.0, %v1675
        %v1677 = vpop.f32.mrb[0].mxu0
        %1678 = vdwg.mxu0
        %1679 = vrot.lane.b32.xlu0 %v528, 104
        %v1680 = vpop.permute.xlu0 %1679
        %1681 = vrot.lane.b32.xlu0 %v605, 104
        %v1682 = vpop.permute.xlu0 %1681
        %v1683 = vsel %vm685, %v1680, 0
        %v1685 = vsel %vm685, %v1682, 0
        %1687 = vmatprep.subr.mxu0 0.0
        %1688 = vmatpush1.xpose.msra.mxu0 %v1685
        %1689 = vmatprep.subr.mxu0 0.0
        %1690 = vmatpush1.xpose.msra.mxu0 0.0
        %1691 = vmatprep.subr.mxu0 0.0
        %1692 = vmatpush1.xpose.msra.mxu0 0.0
        %1693 = vmatprep.subr.mxu0 0.0
        %1694 = vmatpush1.xpose.msra.mxu0 0.0
        %1695 = vmatprep.subr.mxu0 0.0
        %1696 = vmatpush1.xpose.msra.mxu0 0.0
        %1697 = vmatprep.subr.mxu0 0.0
        %1698 = vmatpush1.xpose.msra.mxu0 0.0
        %1699 = vmatprep.subr.mxu0 0.0
        %1700 = vmatpush1.xpose.msra.mxu0 0.0
        %1701 = vmatprep.subr.mxu0 0.0
        %1702 = vmatpush1.xpose.msra.mxu0 0.0
        %1703 = vmatprep.subr.mxu0 0.0
        %1704 = vmatpush1.xpose.msra.mxu0 0.0
        %1705 = vmatprep.subr.mxu0 0.0
        %1706 = vmatpush1.xpose.msra.mxu0 0.0
        %1707 = vmatprep.subr.mxu0 0.0
        %1708 = vmatpush1.xpose.msra.mxu0 0.0
        %1709 = vmatprep.subr.mxu0 0.0
        %1710 = vmatpush1.xpose.msra.mxu0 0.0
        %1711 = vmatprep.subr.mxu0 0.0
        %1712 = vmatpush1.xpose.msra.mxu0 0.0
        %1713 = vmatprep.subr.mxu0 0.0
        %1714 = vmatpush1.xpose.msra.mxu0 0.0
        %1715 = vmatprep.subr.mxu0 0.0
        %1716 = vmatpush1.xpose.msra.mxu0 0.0
        %1717 = vmatprep.subr.mxu0 0.0
        %1718 = vmatpush1.xpose.msra.mxu0 0.0
        %1719 = vmatprep.subr.mxu0 0.0
        %1720 = vmatpush1.xpose.msra.mxu0 0.0
        %1721 = vmatprep.subr.mxu0 0.0
        %1722 = vmatpush1.xpose.msra.mxu0 0.0
        %1723 = vmatprep.subr.mxu0 0.0
        %1724 = vmatpush1.xpose.msra.mxu0 0.0
        %1725 = vmatprep.subr.mxu0 0.0
        %1726 = vmatpush1.xpose.msra.mxu0 0.0
        %1727 = vmatprep.subr.mxu0 0.0
        %1728 = vmatpush1.xpose.msra.mxu0 0.0
        %1729 = vmatprep.subr.mxu0 0.0
        %1730 = vmatpush1.xpose.msra.mxu0 0.0
        %1731 = vmatprep.subr.mxu0 0.0
        %1732 = vmatpush1.xpose.msra.mxu0 0.0
        %1733 = vmatprep.subr.mxu0 0.0
        %1734 = vmatpush1.xpose.msra.mxu0 0.0
        %1735 = vmatprep.subr.mxu0 0.0
        %1736 = vmatpush1.xpose.msra.mxu0 0.0
        %1737 = vmatprep.subr.mxu0 0.0
        %1738 = vmatpush1.xpose.msra.mxu0 0.0
        %1739 = vmatprep.subr.mxu0 0.0
        %1740 = vmatpush1.xpose.msra.mxu0 0.0
        %1741 = vmatprep.subr.mxu0 0.0
        %1742 = vmatpush1.xpose.msra.mxu0 0.0
        %1743 = vmatprep.subr.mxu0 0.0
        %1744 = vmatpush1.xpose.msra.mxu0 0.0
        %1745 = vmatprep.subr.mxu0 0.0
        %1746 = vmatpush1.xpose.msra.mxu0 0.0
        %1747 = vmatprep.subr.mxu0 0.0
        %1748 = vmatpush1.xpose.msra.mxu0 0.0
        %1749 = vmatprep.subr.mxu0 0.0
        %1750 = vmatpush1.xpose.msra.mxu0 0.0
        %1751 = vmatprep.mubr.f32.mxu0 0.0
        %1752 = vmatmul.mubr.f32.gmra.mrb[0].mxu0 %v1683
        %v1753 = vpop.f32.mrb[0].mxu0
        %v1754 = vadd.f32 0.0, %v1753
        %v1755 = vpop.f32.mrb[0].mxu0
        %1756 = vdwg.mxu0
        %v1757 = vmul.f32 %v1754, 0.5
        %v1758 = vsel %vm763, %v1757, -inf
        %1759 = vmax.xlane.f32.xlu0 %v1758
        %v1760 = vpop.xlane.xlu0 %1759
        %v1761 = vsub.f32 %v1757, %v1760
        %v1762 = vmul.f32 %v1761, 1.442695
        %v1763 = vpow.pop %v1762
        %v1764 = vsel %vm763, %v1763, 0.0
        %1765 = vadd.xlane.f32.xlu0 %v1764
        %v1766 = vpop.xlane.xlu0 %1765
        %v1767 = vrcp.pop %v1766
        %v1768 = vmul.f32 %v1763, %v1767
        %1769 = vrot.lane.b32.xlu0 %v682, 104
        %v1770 = vpop.permute.xlu0 %1769
        %v1773 = vsel %vm763, %v1768, 0
        %1775 = vmatprep.subr.mxu0 0.0
        %1776 = vmatpush1.msra.mxu0 %v1770
        %1777 = vmatprep.subr.mxu0 0.0
        %1778 = vmatpush1.msra.mxu0 0.0
        %1779 = vmatprep.subr.mxu0 0.0
        %1780 = vmatpush1.msra.mxu0 0.0
        %1781 = vmatprep.subr.mxu0 0.0
        %1782 = vmatpush1.msra.mxu0 0.0
        %1783 = vmatprep.subr.mxu0 0.0
        %1784 = vmatpush1.msra.mxu0 0.0
        %1785 = vmatprep.subr.mxu0 0.0
        %1786 = vmatpush1.msra.mxu0 0.0
        %1787 = vmatprep.subr.mxu0 0.0
        %1788 = vmatpush1.msra.mxu0 0.0
        %1789 = vmatprep.subr.mxu0 0.0
        %1790 = vmatpush1.msra.mxu0 0.0
        %1791 = vmatprep.subr.mxu0 0.0
        %1792 = vmatpush1.msra.mxu0 0.0
        %1793 = vmatprep.subr.mxu0 0.0
        %1794 = vmatpush1.msra.mxu0 0.0
        %1795 = vmatprep.subr.mxu0 0.0
        %1796 = vmatpush1.msra.mxu0 0.0
        %1797 = vmatprep.subr.mxu0 0.0
        %1798 = vmatpush1.msra.mxu0 0.0
        %1799 = vmatprep.subr.mxu0 0.0
        %1800 = vmatpush1.msra.mxu0 0.0
        %1801 = vmatprep.subr.mxu0 0.0
        %1802 = vmatpush1.msra.mxu0 0.0
        %1803 = vmatprep.subr.mxu0 0.0
        %1804 = vmatpush1.msra.mxu0 0.0
        %1805 = vmatprep.subr.mxu0 0.0
        %1806 = vmatpush1.msra.mxu0 0.0
        %1807 = vmatprep.subr.mxu0 0.0
        %1808 = vmatpush1.msra.mxu0 0.0
        %1809 = vmatprep.subr.mxu0 0.0
        %1810 = vmatpush1.msra.mxu0 0.0
        %1811 = vmatprep.subr.mxu0 0.0
        %1812 = vmatpush1.msra.mxu0 0.0
        %1813 = vmatprep.subr.mxu0 0.0
        %1814 = vmatpush1.msra.mxu0 0.0
        %1815 = vmatprep.subr.mxu0 0.0
        %1816 = vmatpush1.msra.mxu0 0.0
        %1817 = vmatprep.subr.mxu0 0.0
        %1818 = vmatpush1.msra.mxu0 0.0
        %1819 = vmatprep.subr.mxu0 0.0
        %1820 = vmatpush1.msra.mxu0 0.0
        %1821 = vmatprep.subr.mxu0 0.0
        %1822 = vmatpush1.msra.mxu0 0.0
        %1823 = vmatprep.subr.mxu0 0.0
        %1824 = vmatpush1.msra.mxu0 0.0
        %1825 = vmatprep.subr.mxu0 0.0
        %1826 = vmatpush1.msra.mxu0 0.0
        %1827 = vmatprep.subr.mxu0 0.0
        %1828 = vmatpush1.msra.mxu0 0.0
        %1829 = vmatprep.subr.mxu0 0.0
        %1830 = vmatpush1.msra.mxu0 0.0
        %1831 = vmatprep.subr.mxu0 0.0
        %1832 = vmatpush1.msra.mxu0 0.0
        %1833 = vmatprep.subr.mxu0 0.0
        %1834 = vmatpush1.msra.mxu0 0.0
        %1835 = vmatprep.subr.mxu0 0.0
        %1836 = vmatpush1.msra.mxu0 0.0
        %1837 = vmatprep.subr.mxu0 0.0
        %1838 = vmatpush1.msra.mxu0 0.0
        %1839 = vmatprep.mubr.f32.mxu0 0.0
        %1840 = vmatmul.mubr.f32.gmra.mrb[0].mxu0 %v1773
        %v1841 = vpop.f32.mrb[0].mxu0
        %v1842 = vadd.f32 0.0, %v1841
        %v1843 = vpop.f32.mrb[0].mxu0
        %1844 = vdwg.mxu0
        %1845 = vrot.lane.b32.xlu0 %v528, 100
        %v1846 = vpop.permute.xlu0 %1845
        %1847 = vrot.lane.b32.xlu0 %v605, 100
        %v1848 = vpop.permute.xlu0 %1847
        %v1849 = vsel %vm685, %v1846, 0
        %v1851 = vsel %vm685, %v1848, 0
        %1853 = vmatprep.subr.mxu0 0.0
        %1854 = vmatpush1.xpose.msra.mxu0 %v1851
        %1855 = vmatprep.subr.mxu0 0.0
        %1856 = vmatpush1.xpose.msra.mxu0 0.0
        %1857 = vmatprep.subr.mxu0 0.0
        %1858 = vmatpush1.xpose.msra.mxu0 0.0
        %1859 = vmatprep.subr.mxu0 0.0
        %1860 = vmatpush1.xpose.msra.mxu0 0.0
        %1861 = vmatprep.subr.mxu0 0.0
        %1862 = vmatpush1.xpose.msra.mxu0 0.0
        %1863 = vmatprep.subr.mxu0 0.0
        %1864 = vmatpush1.xpose.msra.mxu0 0.0
        %1865 = vmatprep.subr.mxu0 0.0
        %1866 = vmatpush1.xpose.msra.mxu0 0.0
        %1867 = vmatprep.subr.mxu0 0.0
        %1868 = vmatpush1.xpose.msra.mxu0 0.0
        %1869 = vmatprep.subr.mxu0 0.0
        %1870 = vmatpush1.xpose.msra.mxu0 0.0
        %1871 = vmatprep.subr.mxu0 0.0
        %1872 = vmatpush1.xpose.msra.mxu0 0.0
        %1873 = vmatprep.subr.mxu0 0.0
        %1874 = vmatpush1.xpose.msra.mxu0 0.0
        %1875 = vmatprep.subr.mxu0 0.0
        %1876 = vmatpush1.xpose.msra.mxu0 0.0
        %1877 = vmatprep.subr.mxu0 0.0
        %1878 = vmatpush1.xpose.msra.mxu0 0.0
        %1879 = vmatprep.subr.mxu0 0.0
        %1880 = vmatpush1.xpose.msra.mxu0 0.0
        %1881 = vmatprep.subr.mxu0 0.0
        %1882 = vmatpush1.xpose.msra.mxu0 0.0
        %1883 = vmatprep.subr.mxu0 0.0
        %1884 = vmatpush1.xpose.msra.mxu0 0.0
        %1885 = vmatprep.subr.mxu0 0.0
        %1886 = vmatpush1.xpose.msra.mxu0 0.0
        %1887 = vmatprep.subr.mxu0 0.0
        %1888 = vmatpush1.xpose.msra.mxu0 0.0
        %1889 = vmatprep.subr.mxu0 0.0
        %1890 = vmatpush1.xpose.msra.mxu0 0.0
        %1891 = vmatprep.subr.mxu0 0.0
        %1892 = vmatpush1.xpose.msra.mxu0 0.0
        %1893 = vmatprep.subr.mxu0 0.0
        %1894 = vmatpush1.xpose.msra.mxu0 0.0
        %1895 = vmatprep.subr.mxu0 0.0
        %1896 = vmatpush1.xpose.msra.mxu0 0.0
        %1897 = vmatprep.subr.mxu0 0.0
        %1898 = vmatpush1.xpose.msra.mxu0 0.0
        %1899 = vmatprep.subr.mxu0 0.0
        %1900 = vmatpush1.xpose.msra.mxu0 0.0
        %1901 = vmatprep.subr.mxu0 0.0
        %1902 = vmatpush1.xpose.msra.mxu0 0.0
        %1903 = vmatprep.subr.mxu0 0.0
        %1904 = vmatpush1.xpose.msra.mxu0 0.0
        %1905 = vmatprep.subr.mxu0 0.0
        %1906 = vmatpush1.xpose.msra.mxu0 0.0
        %1907 = vmatprep.subr.mxu0 0.0
        %1908 = vmatpush1.xpose.msra.mxu0 0.0
        %1909 = vmatprep.subr.mxu0 0.0
        %1910 = vmatpush1.xpose.msra.mxu0 0.0
        %1911 = vmatprep.subr.mxu0 0.0
        %1912 = vmatpush1.xpose.msra.mxu0 0.0
        %1913 = vmatprep.subr.mxu0 0.0
        %1914 = vmatpush1.xpose.msra.mxu0 0.0
        %1915 = vmatprep.subr.mxu0 0.0
        %1916 = vmatpush1.xpose.msra.mxu0 0.0
        %1917 = vmatprep.mubr.f32.mxu0 0.0
        %1918 = vmatmul.mubr.f32.gmra.mrb[0].mxu0 %v1849
        %v1919 = vpop.f32.mrb[0].mxu0
        %v1920 = vadd.f32 0.0, %v1919
        %v1921 = vpop.f32.mrb[0].mxu0
        %1922 = vdwg.mxu0
        %v1923 = vmul.f32 %v1920, 0.5
        %v1924 = vsel %vm763, %v1923, -inf
        %1925 = vmax.xlane.f32.xlu0 %v1924
        %v1926 = vpop.xlane.xlu0 %1925
        %v1927 = vsub.f32 %v1923, %v1926
        %v1928 = vmul.f32 %v1927, 1.442695
        %v1929 = vpow.pop %v1928
        %v1930 = vsel %vm763, %v1929, 0.0
        %1931 = vadd.xlane.f32.xlu0 %v1930
        %v1932 = vpop.xlane.xlu0 %1931
        %v1933 = vrcp.pop %v1932
        %v1934 = vmul.f32 %v1929, %v1933
        %1935 = vrot.lane.b32.xlu0 %v682, 100
        %v1936 = vpop.permute.xlu0 %1935
        %v1939 = vsel %vm763, %v1934, 0
        %1941 = vmatprep.subr.mxu0 0.0
        %1942 = vmatpush1.msra.mxu0 %v1936
        %1943 = vmatprep.subr.mxu0 0.0
        %1944 = vmatpush1.msra.mxu0 0.0
        %1945 = vmatprep.subr.mxu0 0.0
        %1946 = vmatpush1.msra.mxu0 0.0
        %1947 = vmatprep.subr.mxu0 0.0
        %1948 = vmatpush1.msra.mxu0 0.0
        %1949 = vmatprep.subr.mxu0 0.0
        %1950 = vmatpush1.msra.mxu0 0.0
        %1951 = vmatprep.subr.mxu0 0.0
        %1952 = vmatpush1.msra.mxu0 0.0
        %1953 = vmatprep.subr.mxu0 0.0
        %1954 = vmatpush1.msra.mxu0 0.0
        %1955 = vmatprep.subr.mxu0 0.0
        %1956 = vmatpush1.msra.mxu0 0.0
        %1957 = vmatprep.subr.mxu0 0.0
        %1958 = vmatpush1.msra.mxu0 0.0
        %1959 = vmatprep.subr.mxu0 0.0
        %1960 = vmatpush1.msra.mxu0 0.0
        %1961 = vmatprep.subr.mxu0 0.0
        %1962 = vmatpush1.msra.mxu0 0.0
        %1963 = vmatprep.subr.mxu0 0.0
        %1964 = vmatpush1.msra.mxu0 0.0
        %1965 = vmatprep.subr.mxu0 0.0
        %1966 = vmatpush1.msra.mxu0 0.0
        %1967 = vmatprep.subr.mxu0 0.0
        %1968 = vmatpush1.msra.mxu0 0.0
        %1969 = vmatprep.subr.mxu0 0.0
        %1970 = vmatpush1.msra.mxu0 0.0
        %1971 = vmatprep.subr.mxu0 0.0
        %1972 = vmatpush1.msra.mxu0 0.0
        %1973 = vmatprep.subr.mxu0 0.0
        %1974 = vmatpush1.msra.mxu0 0.0
        %1975 = vmatprep.subr.mxu0 0.0
        %1976 = vmatpush1.msra.mxu0 0.0
        %1977 = vmatprep.subr.mxu0 0.0
        %1978 = vmatpush1.msra.mxu0 0.0
        %1979 = vmatprep.subr.mxu0 0.0
        %1980 = vmatpush1.msra.mxu0 0.0
        %1981 = vmatprep.subr.mxu0 0.0
        %1982 = vmatpush1.msra.mxu0 0.0
        %1983 = vmatprep.subr.mxu0 0.0
        %1984 = vmatpush1.msra.mxu0 0.0
        %1985 = vmatprep.subr.mxu0 0.0
        %1986 = vmatpush1.msra.mxu0 0.0
        %1987 = vmatprep.subr.mxu0 0.0
        %1988 = vmatpush1.msra.mxu0 0.0
        %1989 = vmatprep.subr.mxu0 0.0
        %1990 = vmatpush1.msra.mxu0 0.0
        %1991 = vmatprep.subr.mxu0 0.0
        %1992 = vmatpush1.msra.mxu0 0.0
        %1993 = vmatprep.subr.mxu0 0.0
        %1994 = vmatpush1.msra.mxu0 0.0
        %1995 = vmatprep.subr.mxu0 0.0
        %1996 = vmatpush1.msra.mxu0 0.0
        %1997 = vmatprep.subr.mxu0 0.0
        %1998 = vmatpush1.msra.mxu0 0.0
        %1999 = vmatprep.subr.mxu0 0.0
        %2000 = vmatpush1.msra.mxu0 0.0
        %2001 = vmatprep.subr.mxu0 0.0
        %2002 = vmatpush1.msra.mxu0 0.0
        %2003 = vmatprep.subr.mxu0 0.0
        %2004 = vmatpush1.msra.mxu0 0.0
        %2005 = vmatprep.mubr.f32.mxu0 0.0
        %2006 = vmatmul.mubr.f32.gmra.mrb[0].mxu0 %v1939
        %v2007 = vpop.f32.mrb[0].mxu0
        %v2008 = vadd.f32 0.0, %v2007
        %v2009 = vpop.f32.mrb[0].mxu0
        %2010 = vdwg.mxu0
        %2012 = vrot.lane.b32.xlu0 %v1012, 4
        %v2013 = vpop.permute.xlu0 %2012
        %2016 = vrot.lane.b32.xlu0 %v1178, 8
        %v2017 = vpop.permute.xlu0 %2016
        %2020 = vrot.lane.b32.xlu0 %v1344, 12
        %v2021 = vpop.permute.xlu0 %2020
        %2024 = vrot.lane.b32.xlu0 %v1510, 16
        %v2025 = vpop.permute.xlu0 %2024
        %2028 = vrot.lane.b32.xlu0 %v1676, 20
        %v2029 = vpop.permute.xlu0 %2028
        %2032 = vrot.lane.b32.xlu0 %v1842, 24
        %v2033 = vpop.permute.xlu0 %2032
        %2036 = vrot.lane.b32.xlu0 %v2008, 28
        %v2037 = vpop.permute.xlu0 %2036
        %v2039 = vsel %vm685, %v845, %v2013
        %v2040 = vsel %vm763, %v2039, %v2017
        %vm2041 = vcmask 97280
        %v2042 = vsel %vm2041, %v2040, %v2021
        %vm2043 = vcmask 130048
        %v2044 = vsel %vm2043, %v2042, %v2025
        %vm2045 = vcmask 162816
        %v2046 = vsel %vm2045, %v2044, %v2029
        %vm2047 = vcmask 195584
        %v2048 = vsel %vm2047, %v2046, %v2033
        %vm2049 = vcmask 228352
        %v2050 = vsel %vm2049, %v2048, %v2037
        %v2051 = vld [vmem:[#allocation13] sm:$0xff]
        %v2052 = vld [vmem:[#allocation13 + $0x8] sm:$0xff]
        %v2053 = vld [vmem:[#allocation13 + $0x10] sm:$0xff]
        %v2054 = vld [vmem:[#allocation13 + $0x18] sm:$0xff]
        %s2055 = scalar_lea.vmem %s7, 3
        %v2056 = vld [vmem:[%s2055] sm:$0x1]
        %v2058 = vlaneseq
        %v2059 = vshrl.u32 %v2058, 7
        %v2060 = vsub.s32 0, %v2059
        %v2061 = vrot.slane %v2056, %v2060
        %v2064 = vsel %vm457, %v2050, 0
        %2066 = vmatprep.subr.mxu0 0.0
        %2067 = vmatpush1.msra.mxu0 %v2051
        %2068 = vmatprep.subr.mxu0 0.0
        %2069 = vmatpush1.msra.mxu0 %v2052
        %2070 = vmatprep.subr.mxu0 0.0
        %2071 = vmatpush1.msra.mxu0 %v2053
        %2072 = vmatprep.subr.mxu0 0.0
        %2073 = vmatpush1.msra.mxu0 %v2054
        %2074 = vmatprep.subr.mxu0 0.0
        %2075 = vmatpush1.msra.mxu0 0.0
        %2076 = vmatprep.subr.mxu0 0.0
        %2077 = vmatpush1.msra.mxu0 0.0
        %2078 = vmatprep.subr.mxu0 0.0
        %2079 = vmatpush1.msra.mxu0 0.0
        %2080 = vmatprep.subr.mxu0 0.0
        %2081 = vmatpush1.msra.mxu0 0.0
        %2082 = vmatprep.subr.mxu0 0.0
        %2083 = vmatpush1.msra.mxu0 0.0
        %2084 = vmatprep.subr.mxu0 0.0
        %2085 = vmatpush1.msra.mxu0 0.0
        %2086 = vmatprep.subr.mxu0 0.0
        %2087 = vmatpush1.msra.mxu0 0.0
        %2088 = vmatprep.subr.mxu0 0.0
        %2089 = vmatpush1.msra.mxu0 0.0
        %2090 = vmatprep.subr.mxu0 0.0
        %2091 = vmatpush1.msra.mxu0 0.0
        %2092 = vmatprep.subr.mxu0 0.0
        %2093 = vmatpush1.msra.mxu0 0.0
        %2094 = vmatprep.subr.mxu0 0.0
        %2095 = vmatpush1.msra.mxu0 0.0
        %2096 = vmatprep.subr.mxu0 0.0
        %2097 = vmatpush1.msra.mxu0 0.0
        %2098 = vmatprep.subr.mxu0 0.0
        %2099 = vmatpush1.msra.mxu0 0.0
        %2100 = vmatprep.subr.mxu0 0.0
        %2101 = vmatpush1.msra.mxu0 0.0
        %2102 = vmatprep.subr.mxu0 0.0
        %2103 = vmatpush1.msra.mxu0 0.0
        %2104 = vmatprep.subr.mxu0 0.0
        %2105 = vmatpush1.msra.mxu0 0.0
        %2106 = vmatprep.subr.mxu0 0.0
        %2107 = vmatpush1.msra.mxu0 0.0
        %2108 = vmatprep.subr.mxu0 0.0
        %2109 = vmatpush1.msra.mxu0 0.0
        %2110 = vmatprep.subr.mxu0 0.0
        %2111 = vmatpush1.msra.mxu0 0.0
        %2112 = vmatprep.subr.mxu0 0.0
        %2113 = vmatpush1.msra.mxu0 0.0
        %2114 = vmatprep.subr.mxu0 0.0
        %2115 = vmatpush1.msra.mxu0 0.0
        %2116 = vmatprep.subr.mxu0 0.0
        %2117 = vmatpush1.msra.mxu0 0.0
        %2118 = vmatprep.subr.mxu0 0.0
        %2119 = vmatpush1.msra.mxu0 0.0
        %2120 = vmatprep.subr.mxu0 0.0
        %2121 = vmatpush1.msra.mxu0 0.0
        %2122 = vmatprep.subr.mxu0 0.0
        %2123 = vmatpush1.msra.mxu0 0.0
        %2124 = vmatprep.subr.mxu0 0.0
        %2125 = vmatpush1.msra.mxu0 0.0
        %2126 = vmatprep.subr.mxu0 0.0
        %2127 = vmatpush1.msra.mxu0 0.0
        %2128 = vmatprep.subr.mxu0 0.0
        %2129 = vmatpush1.msra.mxu0 0.0
        %2130 = vmatprep.mubr.f32.mxu0 0.0
        %2131 = vmatmul.mubr.f32.gmra.mrb[0].mxu0 %v2064
        %v2132 = vpop.f32.mrb[0].mxu0
        %v2133 = vadd.f32 %v2061, %v2132
        %v2134 = vpop.f32.mrb[0].mxu0
        %2135 = vdwg.mxu0
        %2136 = vst.msk [vmem:[%s449] sm:$0xff] %vm457, %v2133
        %s2137 = sand.u32 %s221, 1
        %s2138 = scalar_lea.sflag [#allocation4], %s2137
        %s2139 = sand.u32 %s221, 1
        %s2140 = smul.addr %s2139, 8
        %s2141 = scalar_lea.vmem [#allocation14], %s2140
        // Predicated region
        $region81: #{tpu_custom_call.1} parent=51 // pred_check
          %p2142 = pneg %p231
        $region82: #{tpu_custom_call.1} parent=51 // pred_check_branch
          %2144 = sbr.rel (%p2142) target = $region84
        $region83: #{tpu_custom_call.1} parent=51 // pred_region
          %s2146 = ssub.s32 128, 128
          %2147 = vsyncadd %s2138, %s2146
          %s2148 = smul.addr %s30, 128
          %s2149 = scalar_lea.hbm %s8, %s2148
          %s2151 = sshll.u32 %s2141, 4
          %s2152 = int_to_ptr.vmem [resolvable:$true] %s2151
          %2154 = dma.vmem_to_hbm [thread:$0]  %s2152, 128, %s2149, %s2138
        $region84: #{tpu_custom_call.1} parent=51 // pred_fallthru
          _
      $region52: #{tpu_custom_call.1} parent=5 // pred_fallthru
        _
      %p2155 = scmp.le.s32.totalorder 2, %s25
      // Predicated region
      $region85: #{tpu_custom_call.1} parent=5 // pred_check
        %p2156 = pneg %p2155
      $region86: #{tpu_custom_call.1} parent=5 // pred_check_branch
        %2158 = sbr.rel (%p2156) target = $region88
      $region87: #{tpu_custom_call.1} parent=5 // pred_region
        %s2159 = ssub.s32 %s25, 2
        // Predicated region
        $region89: #{tpu_custom_call.1} parent=87 // pred_check
          %p2160 = pneg %p237
        $region90: #{tpu_custom_call.1} parent=87 // pred_check_branch
          %2162 = sbr.rel (%p2160) target = $region92
        $region91: #{tpu_custom_call.1} parent=87 // pred_region
          %s2163 = sand.u32 %s222, 1
          %s2164 = scalar_lea.sflag [#allocation4], %s2163
          %s2165 = sand.u32 %s222, 1
          %s2166 = smul.addr %s2165, 8
          %s2167 = scalar_lea.vmem [#allocation14], %s2166
          %2168 = dma.done %s2164, 128
        $region92: #{tpu_custom_call.1} parent=87 // pred_fallthru
          _
      $region88: #{tpu_custom_call.1} parent=5 // pred_fallthru
        _
    $region6: #{tpu_custom_call.1} parent=1 // loop_footer
      %s29 = sadd.s32 1, %s25
    $region7: #{tpu_custom_call.1} parent=1 // loop_footer_branch
      %24 = sbr.rel target = $region3
    $region8: #{tpu_custom_call.1} parent=1 // loop_exit
      _
    %2169 = vsyncpa [#allocation3], 1
    %s2170 = scalar_lea.sflag [#allocation3], 1
    %2171 = vsyncpa %s2170, 1
    %2172 = vsyncpa [#allocation6], 1
    %s2173 = scalar_lea.sflag [#allocation6], 1
    %2174 = vsyncpa %s2173, 1
    %2175 = vsyncpa [#allocation9], 1
    %2176 = vsyncpa [#allocation12], 1
    %2177 = vsyncpa [#allocation4], 1
    %s2178 = scalar_lea.sflag [#allocation4], 1
    %2179 = vsyncpa %s2178, 1

</llo_original>
